<compile_context>
chip_gen: v7x
topology: tpu7x:2x2x1
jax: 0.10.0
libtpu: 0.0.40
codegen_flags: <defaults>
</compile_context>

<pallas_src>
import math

import jax
import jax.numpy as jnp
from jax.experimental import pallas as pl
from jax.experimental.pallas import tpu as pltpu


def _layer_norm(x, gamma, beta, eps=1e-5):
    mean = jnp.mean(x, axis=-1, keepdims=True)
    var = jnp.mean((x - mean) ** 2, axis=-1, keepdims=True)
    return (x - mean) * jax.lax.rsqrt(var + eps) * gamma + beta


def _pick_block(n, max_block):
    # largest block <= max_block that divides n and keeps the sublane dim a multiple of 8
    for t in (512, 256, 128, 64, 32, 16, 8):
        if t <= max_block and n % t == 0:
            return t
    return n  # fall back to the full (possibly unaligned) extent


def _vmem_capacity_bytes():
    try:
        return int(pltpu.get_tpu_info().vmem_capacity_bytes)
    except Exception:
        return 64 << 20  # conservative default (v7x per-TC)


def encoder_block_pallas(x, key_padding_mask, params, n_head, *,
                         matmul_dtype=jnp.bfloat16, approx_reciprocal=True):
    """x: (B, S, D) float32; key_padding_mask: (B, S) bool (True = padded key)."""
    B, S, D = x.shape
    HD = D // n_head
    Hf = params["w1"].shape[1]
    cd = jnp.dtype(matmul_dtype)
    f32 = jnp.float32
    scale = 1.0 / math.sqrt(HD)

    vmem_cap = _vmem_capacity_bytes()
    # larger q-blocks on 128 MiB parts (v5e/v6e), tighter on 64 MiB (v7x)
    TQ = _pick_block(S, 512 if vmem_cap >= (96 << 20) else 256)
    TK = _pick_block(S, 512)
    n_q, n_kv = S // TQ, S // TK

    # ---- wrapper-side (XLA) precompute: one fused QKV GEMM, head-major layouts, done once ----
    qkv = x @ params["wqkv"] + params["bqkv"]                                  # (B, S, 3D) f32
    q, k, v = jnp.split(qkv, 3, axis=-1)
    # softmax scale folded into Q (after bias, matching q@k^T * scale in the reference)
    q_hm = (q * scale).reshape(B, S, n_head, HD).transpose(0, 2, 1, 3).astype(cd)  # (B,H,S,HD)
    kT_hm = k.reshape(B, S, n_head, HD).transpose(0, 2, 3, 1).astype(cd)           # (B,H,HD,S)
    v_hm = v.reshape(B, S, n_head, HD).transpose(0, 2, 1, 3).astype(cd)            # (B,H,S,HD)
    add_mask = jnp.where(key_padding_mask, -1e9, 0.0).astype(f32)[:, None, :]      # (B,1,S)

    wproj = params["wproj"].astype(cd)                                         # (D, D)
    bproj = params["bproj"].reshape(1, D).astype(f32)
    g0 = params["ln0_g"].reshape(1, D).astype(f32)
    be0 = params["ln0_b"].reshape(1, D).astype(f32)
    g1 = params["ln1_g"].reshape(1, D).astype(f32)
    be1 = params["ln1_b"].reshape(1, D).astype(f32)
    w1 = params["w1"].astype(cd)                                               # (D, Hf)
    b1 = params["b1"].reshape(1, Hf).astype(f32)
    w2 = params["w2"].astype(cd)                                               # (Hf, D)
    b2 = params["b2"].reshape(1, D).astype(f32)
    weight_args = (wproj, bproj, g0, be0, g1, be1, w1, b1, w2, b2)

    def kernel(xq_ref, q_ref, kT_ref, v_ref, mask_ref,
               wproj_ref, bproj_ref, g0_ref, be0_ref, g1_ref, be1_ref,
               w1_ref, b1_ref, w2_ref, b2_ref,
               o_ref, m_sc, l_sc, acc_sc):
        kv = pl.program_id(2)

        @pl.when(kv == 0)
        def _():
            m_sc[...] = jnp.full_like(m_sc, -jnp.inf)
            l_sc[...] = jnp.zeros_like(l_sc)
            acc_sc[...] = jnp.zeros_like(acc_sc)

        q3 = q_ref[0]            # (H, TQ, HD) cd
        kT = kT_ref[0]           # (H, HD, TK) cd (already transposed -> no in-kernel XLU transpose)
        v3 = v_ref[0]            # (H, TK, HD) cd

        # scores for this KV tile, f32 accumulation on the MXU
        s = jax.lax.dot_general(q3, kT, (((2,), (1,)), ((0,), (0,))),
                                preferred_element_type=f32)                   # (H, TQ, TK)
        s = s + mask_ref[...]                                                 # key-padding mask

        # online softmax update (f32)
        m_prev = m_sc[...]
        m_new = jnp.maximum(m_prev, jnp.max(s, axis=-1, keepdims=True))
        alpha = jnp.exp(m_prev - m_new)
        p = jnp.exp(s - m_new)
        l_sc[...] = alpha * l_sc[...] + jnp.sum(p, axis=-1, keepdims=True)
        pv = jax.lax.dot_general(p.astype(cd), v3, (((2,), (1,)), ((0,), (0,))),
                                 preferred_element_type=f32)                  # (H, TQ, HD)
        acc_sc[...] = alpha * acc_sc[...] + pv
        m_sc[...] = m_new

        # epilogue only after the last KV tile: normalize, project, residual + LN, MLP, LN
        @pl.when(kv == pl.num_programs(2) - 1)
        def _():
            inv_l = pl.reciprocal(l_sc[...], approx=approx_reciprocal)
            o3 = acc_sc[...] * inv_l                                          # (H, TQ, HD) f32
            # head concat -> (TQ, D), then one full-width K=D output-projection GEMM
            attn = jnp.transpose(o3, (1, 0, 2)).reshape(TQ, D)
            attn_out = jnp.dot(attn.astype(cd), wproj_ref[...],
                               preferred_element_type=f32) + bproj_ref[...]

            xq = xq_ref[0]                                                    # (TQ, D) f32 residual
            x1 = _layer_norm(xq + attn_out, g0_ref[...], be0_ref[...])

            h1 = jnp.dot(x1.astype(cd), w1_ref[...], preferred_element_type=f32) + b1_ref[...]
            h1 = jnp.maximum(h1, 0.0)
            mlp = jnp.dot(h1.astype(cd), w2_ref[...], preferred_element_type=f32) + b2_ref[...]

            o_ref[0] = _layer_norm(x1 + mlp, g1_ref[...], be1_ref[...]).astype(o_ref.dtype)

    def _const_spec(a):
        idx = lambda b, qi, kv, n=a.ndim: (0,) * n
        try:
            # loop-invariant weights: single-buffer (halves weight VMEM)
            return pl.BlockSpec(a.shape, idx, pipeline_mode=pl.Buffered(1))
        except Exception:
            return pl.BlockSpec(a.shape, idx)

    in_specs = [
        pl.BlockSpec((1, TQ, D), lambda b, qi, kv: (b, qi, 0)),               # x query block (residual)
        pl.BlockSpec((1, n_head, TQ, HD), lambda b, qi, kv: (b, 0, qi, 0)),   # Q head-major
        pl.BlockSpec((1, n_head, HD, TK), lambda b, qi, kv: (b, 0, 0, kv)),   # K^T head-major tile
        pl.BlockSpec((1, n_head, TK, HD), lambda b, qi, kv: (b, 0, kv, 0)),   # V head-major tile
        pl.BlockSpec((1, 1, TK), lambda b, qi, kv: (b, 0, kv)),               # additive key mask tile
    ] + [_const_spec(a) for a in weight_args]

    # ---- VMEM budget derived from actual tile/weight footprint and chip capacity ----
    cdi = cd.itemsize
    stream_bytes = (TQ * D * 4 + TQ * D * cdi + 2 * TK * D * cdi + TK * 4 + TQ * D * 4)
    weight_bytes = (D * D + D * Hf + Hf * D) * cdi + (8 * D + Hf) * 4          # single-buffered
    scratch_bytes = (2 * n_head * TQ + n_head * TQ * HD) * 4
    act_bytes = (3 * n_head * TQ * TK * 4 + n_head * TQ * HD * 4
                 + TQ * (3 * D + Hf) * 4 + TQ * (2 * D + Hf) * cdi)
    est = 2 * stream_bytes + weight_bytes + scratch_bytes + act_bytes + (4 << 20)
    vmem_limit = int(min(max(est, 32 << 20), max(vmem_cap - (8 << 20), 32 << 20)))

    out = pl.pallas_call(
        kernel,
        out_shape=jax.ShapeDtypeStruct((B, S, D), x.dtype),
        grid_spec=pltpu.PrefetchScalarGridSpec(
            num_scalar_prefetch=0,
            grid=(B, n_q, n_kv),
            in_specs=in_specs,
            out_specs=pl.BlockSpec((1, TQ, D), lambda b, qi, kv: (b, qi, 0)),
            scratch_shapes=[
                pltpu.VMEM((n_head, TQ, 1), f32),   # running max
                pltpu.VMEM((n_head, TQ, 1), f32),   # running sum
                pltpu.VMEM((n_head, TQ, HD), f32),  # running (unnormalized) attention output
            ]),
        compiler_params=pltpu.CompilerParams(
            dimension_semantics=("parallel", "parallel", "arbitrary"),
            vmem_limit_bytes=vmem_limit),
    )(x, q_hm, kT_hm, v_hm, add_mask, *weight_args)
    return out


def encoder_block_ref(x, key_padding_mask, params, n_head):
    """Pure-JAX reference matching the PyTorch post-norm forward."""
    B, S, D = x.shape
    HD = D // n_head
    scale = 1.0 / math.sqrt(HD)
    add_mask = jnp.where(key_padding_mask, -1e9, 0.0)[:, None, None, :]       # (B,1,1,S)

    qkv = x @ params["wqkv"] + params["bqkv"]                                 # (B,S,3D)
    q, k, v = jnp.split(qkv, 3, axis=-1)
    q = q.reshape(B, S, n_head, HD).transpose(0, 2, 1, 3)
    k = k.reshape(B, S, n_head, HD).transpose(0, 2, 1, 3)
    v = v.reshape(B, S, n_head, HD).transpose(0, 2, 1, 3)
    s = jnp.einsum("bhqd,bhkd->bhqk", q, k) * scale + add_mask
    p = jax.nn.softmax(s, axis=-1)
    attn = jnp.einsum("bhqk,bhkd->bhqd", p, v).transpose(0, 2, 1, 3).reshape(B, S, D)
    attn_out = attn @ params["wproj"] + params["bproj"]

    x1 = _layer_norm(x + attn_out, params["ln0_g"], params["ln0_b"])
    h1 = jnp.maximum(x1 @ params["w1"] + params["b1"], 0.0)
    mlp_out = h1 @ params["w2"] + params["b2"]
    return _layer_norm(x1 + mlp_out, params["ln1_g"], params["ln1_b"])


def init_params(key, d_model, hidden_dim):
    ks = jax.random.split(key, 6)
    sc = 0.02
    return {
        "wqkv": sc * jax.random.normal(ks[0], (d_model, 3 * d_model), jnp.float32),
        "bqkv": jnp.zeros((3 * d_model,), jnp.float32),
        "wproj": sc * jax.random.normal(ks[1], (d_model, d_model), jnp.float32),
        "bproj": jnp.zeros((d_model,), jnp.float32),
        "ln0_g": jnp.ones((d_model,), jnp.float32),
        "ln0_b": jnp.zeros((d_model,), jnp.float32),
        "ln1_g": jnp.ones((d_model,), jnp.float32),
        "ln1_b": jnp.zeros((d_model,), jnp.float32),
        "w1": sc * jax.random.normal(ks[2], (d_model, hidden_dim), jnp.float32),
        "b1": sc * jax.random.normal(ks[3], (hidden_dim,), jnp.float32),
        "w2": sc * jax.random.normal(ks[4], (hidden_dim, d_model), jnp.float32),
        "b2": sc * jax.random.normal(ks[5], (d_model,), jnp.float32),
    }


if __name__ == "__main__":
    B, S, D = 2, 8, 32
    N_HEAD = 4
    FF_HIDDEN = 64

    key = jax.random.PRNGKey(0)
    kx, kp = jax.random.split(key)
    x = jax.random.normal(kx, (B, S, D), jnp.float32)
    # key_padding_mask: True = padded position (ignored as attention key)
    key_padding_mask = jnp.zeros((B, S), jnp.bool_).at[1, -2:].set(True)
    params = init_params(kp, D, FF_HIDDEN)

    ref = encoder_block_ref(x, key_padding_mask, params, N_HEAD)

    # strict-accuracy mode: f32 MXU operands, exact reciprocal in the softmax normalization
    out_f32 = jax.block_until_ready(encoder_block_pallas(
        x, key_padding_mask, params, N_HEAD,
        matmul_dtype=jnp.float32, approx_reciprocal=False))
    assert out_f32.shape == (B, S, D)
    assert jnp.allclose(out_f32, ref, rtol=2e-3, atol=2e-3), "f32 mismatch vs reference"

    # production mode: bf16 MXU operands + approx EUP reciprocal
    out_bf16 = jax.block_until_ready(encoder_block_pallas(
        x, key_padding_mask, params, N_HEAD, matmul_dtype=jnp.bfloat16))
    assert jnp.allclose(out_bf16, ref, rtol=3e-2, atol=3e-2), "bf16 mismatch vs reference"

    print("KERNEL_OK")
</pallas_src>

<mosaic_0001>
module attributes {stable_mosaic.version = 11 : i64} {
  func.func @kernel(%arg0: i32, %arg1: i32, %arg2: i32, %arg3: memref<1x8x32xf32, #tpu.memory_space<vmem>>, %arg4: memref<1x4x8x8xf32, #tpu.memory_space<vmem>>, %arg5: memref<1x4x8x8xf32, #tpu.memory_space<vmem>>, %arg6: memref<1x4x8x8xf32, #tpu.memory_space<vmem>>, %arg7: memref<1x1x8xf32, #tpu.memory_space<vmem>>, %arg8: memref<32x32xf32, #tpu.memory_space<vmem>>, %arg9: memref<1x32xf32, #tpu.memory_space<vmem>>, %arg10: memref<1x32xf32, #tpu.memory_space<vmem>>, %arg11: memref<1x32xf32, #tpu.memory_space<vmem>>, %arg12: memref<1x32xf32, #tpu.memory_space<vmem>>, %arg13: memref<1x32xf32, #tpu.memory_space<vmem>>, %arg14: memref<32x64xf32, #tpu.memory_space<vmem>>, %arg15: memref<1x64xf32, #tpu.memory_space<vmem>>, %arg16: memref<64x32xf32, #tpu.memory_space<vmem>>, %arg17: memref<1x32xf32, #tpu.memory_space<vmem>>, %arg18: memref<1x8x32xf32, #tpu.memory_space<vmem>>, %arg19: memref<4x8x1xf32, #tpu.memory_space<vmem>>, %arg20: memref<4x8x1xf32, #tpu.memory_space<vmem>>, %arg21: memref<4x8x8xf32, #tpu.memory_space<vmem>>) attributes {dimension_semantics = [#tpu.dimension_semantics<parallel>, #tpu.dimension_semantics<parallel>, #tpu.dimension_semantics<arbitrary>], iteration_bounds = array<i64: 2, 1, 1>, scalar_prefetch = 0 : i64, scratch_operands = 3 : i64, tpu.core_type = #tpu.core_type<tc>, window_params = [{transform_indices = @transform_0, window_bounds = array<i64: 1, 8, 32>}, {transform_indices = @transform_1, window_bounds = array<i64: 1, 4, 8, 8>}, {transform_indices = @transform_2, window_bounds = array<i64: 1, 4, 8, 8>}, {transform_indices = @transform_3, window_bounds = array<i64: 1, 4, 8, 8>}, {transform_indices = @transform_4, window_bounds = array<i64: 1, 1, 8>}, {pipeline_mode = #tpu.pipeline_mode<synchronous>, transform_indices = @transform_5, window_bounds = array<i64: 32, 32>}, {pipeline_mode = #tpu.pipeline_mode<synchronous>, transform_indices = @transform_6, window_bounds = array<i64: 1, 32>}, {pipeline_mode = #tpu.pipeline_mode<synchronous>, transform_indices = @transform_7, window_bounds = array<i64: 1, 32>}, {pipeline_mode = #tpu.pipeline_mode<synchronous>, transform_indices = @transform_8, window_bounds = array<i64: 1, 32>}, {pipeline_mode = #tpu.pipeline_mode<synchronous>, transform_indices = @transform_9, window_bounds = array<i64: 1, 32>}, {pipeline_mode = #tpu.pipeline_mode<synchronous>, transform_indices = @transform_10, window_bounds = array<i64: 1, 32>}, {pipeline_mode = #tpu.pipeline_mode<synchronous>, transform_indices = @transform_11, window_bounds = array<i64: 32, 64>}, {pipeline_mode = #tpu.pipeline_mode<synchronous>, transform_indices = @transform_12, window_bounds = array<i64: 1, 64>}, {pipeline_mode = #tpu.pipeline_mode<synchronous>, transform_indices = @transform_13, window_bounds = array<i64: 64, 32>}, {pipeline_mode = #tpu.pipeline_mode<synchronous>, transform_indices = @transform_14, window_bounds = array<i64: 1, 32>}, {transform_indices = @transform_15, window_bounds = array<i64: 1, 8, 32>}]} {
    %c0_i32 = arith.constant 0 : i32
    %0 = arith.cmpi eq, %arg2, %c0_i32 : i32
    %1 = arith.extui %0 : i1 to i32
    %c0_i32_0 = arith.constant 0 : i32
    %2 = arith.cmpi ne, %1, %c0_i32_0 : i32
    scf.if %2 {
      %cst_38 = arith.constant 0xFF800000 : f32
      %38 = vector.broadcast %cst_38 : f32 to vector<4x8x1xf32>
      %c0_39 = arith.constant 0 : index
      %c0_40 = arith.constant 0 : index
      %c0_41 = arith.constant 0 : index
      %39 = vector.load %arg19[%c0_39, %c0_40, %c0_41] : memref<4x8x1xf32, #tpu.memory_space<vmem>>, vector<4x8x1xf32>
      tpu.vector_store %arg19[%c0_39, %c0_40, %c0_41], %38 {strides = array<i32>} : memref<4x8x1xf32, #tpu.memory_space<vmem>>, vector<4x8x1xf32>,
      %cst_42 = arith.constant 0.000000e+00 : f32
      %40 = vector.broadcast %cst_42 : f32 to vector<4x8x1xf32>
      %c0_43 = arith.constant 0 : index
      %c0_44 = arith.constant 0 : index
      %c0_45 = arith.constant 0 : index
      %41 = vector.load %arg20[%c0_43, %c0_44, %c0_45] : memref<4x8x1xf32, #tpu.memory_space<vmem>>, vector<4x8x1xf32>
      tpu.vector_store %arg20[%c0_43, %c0_44, %c0_45], %40 {strides = array<i32>} : memref<4x8x1xf32, #tpu.memory_space<vmem>>, vector<4x8x1xf32>,
      %cst_46 = arith.constant 0.000000e+00 : f32
      %42 = vector.broadcast %cst_46 : f32 to vector<4x8x8xf32>
      %c0_47 = arith.constant 0 : index
      %c0_48 = arith.constant 0 : index
      %c0_49 = arith.constant 0 : index
      %43 = vector.load %arg21[%c0_47, %c0_48, %c0_49] : memref<4x8x8xf32, #tpu.memory_space<vmem>>, vector<4x8x8xf32>
      tpu.vector_store %arg21[%c0_47, %c0_48, %c0_49], %42 {strides = array<i32>} : memref<4x8x8xf32, #tpu.memory_space<vmem>>, vector<4x8x8xf32>,
    } else {
    }
    %c0 = arith.constant 0 : index
    %c0_1 = arith.constant 0 : index
    %c0_2 = arith.constant 0 : index
    %c0_3 = arith.constant 0 : index
    %3 = vector.load %arg4[%c0, %c0_1, %c0_2, %c0_3] : memref<1x4x8x8xf32, #tpu.memory_space<vmem>>, vector<1x4x8x8xf32>
    %4 = vector.shape_cast %3 : vector<1x4x8x8xf32> to vector<4x8x8xf32>
    %c0_4 = arith.constant 0 : index
    %c0_5 = arith.constant 0 : index
    %c0_6 = arith.constant 0 : index
    %c0_7 = arith.constant 0 : index
    %5 = vector.load %arg5[%c0_4, %c0_5, %c0_6, %c0_7] : memref<1x4x8x8xf32, #tpu.memory_space<vmem>>, vector<1x4x8x8xf32>
    %6 = vector.shape_cast %5 : vector<1x4x8x8xf32> to vector<4x8x8xf32>
    %c0_8 = arith.constant 0 : index
    %c0_9 = arith.constant 0 : index
    %c0_10 = arith.constant 0 : index
    %c0_11 = arith.constant 0 : index
    %7 = vector.load %arg6[%c0_8, %c0_9, %c0_10, %c0_11] : memref<1x4x8x8xf32, #tpu.memory_space<vmem>>, vector<1x4x8x8xf32>
    %8 = vector.shape_cast %7 : vector<1x4x8x8xf32> to vector<4x8x8xf32>
    %cst = arith.constant dense<0.000000e+00> : vector<4x8x8xf32>
    %9 = tpu.matmul %4, %6, %cst {dimension_numbers = #tpu.dot_dimension_numbers<[2], [1], [1], [2], [0, 0, 0, 1, 1, 2], [0], [0]>} : vector<4x8x8xf32>, vector<4x8x8xf32>, vector<4x8x8xf32> -> vector<4x8x8xf32>
    %c0_12 = arith.constant 0 : index
    %c0_13 = arith.constant 0 : index
    %c0_14 = arith.constant 0 : index
    %10 = vector.load %arg7[%c0_12, %c0_13, %c0_14] : memref<1x1x8xf32, #tpu.memory_space<vmem>>, vector<1x1x8xf32>
    %11 = vector.broadcast %10 : vector<1x1x8xf32> to vector<4x8x8xf32>
    %12 = arith.addf %9, %11 : vector<4x8x8xf32>
    %c0_15 = arith.constant 0 : index
    %c0_16 = arith.constant 0 : index
    %c0_17 = arith.constant 0 : index
    %13 = vector.load %arg19[%c0_15, %c0_16, %c0_17] : memref<4x8x1xf32, #tpu.memory_space<vmem>>, vector<4x8x1xf32>
    %cst_18 = arith.constant dense<0xFF800000> : vector<4x8xf32>
    %14 = vector.multi_reduction <maximumf>, %12, %cst_18 [2] : vector<4x8x8xf32> to vector<4x8xf32>
    %15 = vector.shape_cast %14 : vector<4x8xf32> to vector<4x8x1xf32>
    %16 = arith.maximumf %13, %15 : vector<4x8x1xf32>
    %17 = arith.subf %13, %16 : vector<4x8x1xf32>
    %18 = math.exp %17 : vector<4x8x1xf32>
    %19 = vector.broadcast %16 : vector<4x8x1xf32> to vector<4x8x8xf32>
    %20 = arith.subf %12, %19 : vector<4x8x8xf32>
    %21 = math.exp %20 : vector<4x8x8xf32>
    %c0_19 = arith.constant 0 : index
    %c0_20 = arith.constant 0 : index
    %c0_21 = arith.constant 0 : index
    %22 = vector.load %arg20[%c0_19, %c0_20, %c0_21] : memref<4x8x1xf32, #tpu.memory_space<vmem>>, vector<4x8x1xf32>
    %23 = arith.mulf %18, %22 : vector<4x8x1xf32>
    %cst_22 = arith.constant dense<0.000000e+00> : vector<4x8xf32>
    %24 = vector.multi_reduction <add>, %21, %cst_22 [2] : vector<4x8x8xf32> to vector<4x8xf32>
    %25 = vector.shape_cast %24 : vector<4x8xf32> to vector<4x8x1xf32>
    %26 = arith.addf %23, %25 : vector<4x8x1xf32>
    %c0_23 = arith.constant 0 : index
    %c0_24 = arith.constant 0 : index
    %c0_25 = arith.constant 0 : index
    %27 = vector.load %arg20[%c0_23, %c0_24, %c0_25] : memref<4x8x1xf32, #tpu.memory_space<vmem>>, vector<4x8x1xf32>
    tpu.vector_store %arg20[%c0_23, %c0_24, %c0_25], %26 {strides = array<i32>} : memref<4x8x1xf32, #tpu.memory_space<vmem>>, vector<4x8x1xf32>,
    %cst_26 = arith.constant dense<0.000000e+00> : vector<4x8x8xf32>
    %28 = tpu.matmul %21, %8, %cst_26 {dimension_numbers = #tpu.dot_dimension_numbers<[2], [1], [1], [2], [0, 0, 0, 1, 1, 2], [0], [0]>} : vector<4x8x8xf32>, vector<4x8x8xf32>, vector<4x8x8xf32> -> vector<4x8x8xf32>
    %c0_27 = arith.constant 0 : index
    %c0_28 = arith.constant 0 : index
    %c0_29 = arith.constant 0 : index
    %29 = vector.load %arg21[%c0_27, %c0_28, %c0_29] : memref<4x8x8xf32, #tpu.memory_space<vmem>>, vector<4x8x8xf32>
    %30 = vector.broadcast %18 : vector<4x8x1xf32> to vector<4x8x8xf32>
    %31 = arith.mulf %30, %29 : vector<4x8x8xf32>
    %32 = arith.addf %31, %28 : vector<4x8x8xf32>
    %c0_30 = arith.constant 0 : index
    %c0_31 = arith.constant 0 : index
    %c0_32 = arith.constant 0 : index
    %33 = vector.load %arg21[%c0_30, %c0_31, %c0_32] : memref<4x8x8xf32, #tpu.memory_space<vmem>>, vector<4x8x8xf32>
    tpu.vector_store %arg21[%c0_30, %c0_31, %c0_32], %32 {strides = array<i32>} : memref<4x8x8xf32, #tpu.memory_space<vmem>>, vector<4x8x8xf32>,
    %c0_33 = arith.constant 0 : index
    %c0_34 = arith.constant 0 : index
    %c0_35 = arith.constant 0 : index
    %34 = vector.load %arg19[%c0_33, %c0_34, %c0_35] : memref<4x8x1xf32, #tpu.memory_space<vmem>>, vector<4x8x1xf32>
    tpu.vector_store %arg19[%c0_33, %c0_34, %c0_35], %16 {strides = array<i32>} : memref<4x8x1xf32, #tpu.memory_space<vmem>>, vector<4x8x1xf32>,
    %c0_i32_36 = arith.constant 0 : i32
    %35 = arith.cmpi eq, %arg2, %c0_i32_36 : i32
    %36 = arith.extui %35 : i1 to i32
    %c0_i32_37 = arith.constant 0 : i32
    %37 = arith.cmpi ne, %36, %c0_i32_37 : i32
    scf.if %37 {
      %c0_38 = arith.constant 0 : index
      %c0_39 = arith.constant 0 : index
      %c0_40 = arith.constant 0 : index
      %38 = vector.load %arg20[%c0_38, %c0_39, %c0_40] : memref<4x8x1xf32, #tpu.memory_space<vmem>>, vector<4x8x1xf32>
      %39 = tpu.reciprocal %38 : vector<4x8x1xf32> -> vector<4x8x1xf32>
      %c0_41 = arith.constant 0 : index
      %c0_42 = arith.constant 0 : index
      %c0_43 = arith.constant 0 : index
      %40 = vector.load %arg21[%c0_41, %c0_42, %c0_43] : memref<4x8x8xf32, #tpu.memory_space<vmem>>, vector<4x8x8xf32>
      %41 = vector.broadcast %39 : vector<4x8x1xf32> to vector<4x8x8xf32>
      %42 = arith.mulf %40, %41 : vector<4x8x8xf32>
      %43 = tpu.transpose %42, [1, 0, 2] : vector<4x8x8xf32> -> vector<8x4x8xf32>
      %44 = vector.shape_cast %43 : vector<8x4x8xf32> to vector<8x32xf32>
      %c0_44 = arith.constant 0 : index
      %c0_45 = arith.constant 0 : index
      %45 = vector.load %arg8[%c0_44, %c0_45] : memref<32x32xf32, #tpu.memory_space<vmem>>, vector<32x32xf32>
      %cst_46 = arith.constant dense<0.000000e+00> : vector<8x32xf32>
      %46 = tpu.matmul %44, %45, %cst_46 {dimension_numbers = #tpu.dot_dimension_numbers<[1], [0], [0], [1], [0, 0, 1, 1], [], []>} : vector<8x32xf32>, vector<32x32xf32>, vector<8x32xf32> -> vector<8x32xf32>
      %c0_47 = arith.constant 0 : index
      %c0_48 = arith.constant 0 : index
      %47 = vector.load %arg9[%c0_47, %c0_48] : memref<1x32xf32, #tpu.memory_space<vmem>>, vector<1x32xf32>
      %48 = vector.broadcast %47 : vector<1x32xf32> to vector<8x32xf32>
      %49 = arith.addf %46, %48 : vector<8x32xf32>
      %c0_49 = arith.constant 0 : index
      %c0_50 = arith.constant 0 : index
      %c0_51 = arith.constant 0 : index
      %50 = vector.load %arg3[%c0_49, %c0_50, %c0_51] : memref<1x8x32xf32, #tpu.memory_space<vmem>>, vector<1x8x32xf32>
      %51 = vector.shape_cast %50 : vector<1x8x32xf32> to vector<8x32xf32>
      %52 = arith.addf %51, %49 : vector<8x32xf32>
      %c0_52 = arith.constant 0 : index
      %c0_53 = arith.constant 0 : index
      %53 = vector.load %arg10[%c0_52, %c0_53] : memref<1x32xf32, #tpu.memory_space<vmem>>, vector<1x32xf32>
      %c0_54 = arith.constant 0 : index
      %c0_55 = arith.constant 0 : index
      %54 = vector.load %arg11[%c0_54, %c0_55] : memref<1x32xf32, #tpu.memory_space<vmem>>, vector<1x32xf32>
      %cst_56 = arith.constant dense<0.000000e+00> : vector<8xf32>
      %55 = vector.multi_reduction <add>, %52, %cst_56 [1] : vector<8x32xf32> to vector<8xf32>
      %56 = vector.shape_cast %55 : vector<8xf32> to vector<8x1xf32>
      %cst_57 = arith.constant 3.200000e+01 : f32
      %57 = vector.broadcast %cst_57 : f32 to vector<8x1xf32>
      %58 = arith.divf %56, %57 : vector<8x1xf32>
      %59 = vector.broadcast %58 : vector<8x1xf32> to vector<8x32xf32>
      %60 = arith.subf %52, %59 : vector<8x32xf32>
      %61 = arith.mulf %60, %60 : vector<8x32xf32>
      %cst_58 = arith.constant dense<0.000000e+00> : vector<8xf32>
      %62 = vector.multi_reduction <add>, %61, %cst_58 [1] : vector<8x32xf32> to vector<8xf32>
      %63 = vector.shape_cast %62 : vector<8xf32> to vector<8x1xf32>
      %cst_59 = arith.constant 3.200000e+01 : f32
      %64 = vector.broadcast %cst_59 : f32 to vector<8x1xf32>
      %65 = arith.divf %63, %64 : vector<8x1xf32>
      %66 = vector.broadcast %58 : vector<8x1xf32> to vector<8x32xf32>
      %67 = arith.subf %52, %66 : vector<8x32xf32>
      %cst_60 = arith.constant 9.99999974E-6 : f32
      %68 = vector.broadcast %cst_60 : f32 to vector<8x1xf32>
      %69 = arith.addf %65, %68 : vector<8x1xf32>
      %70 = math.rsqrt %69 : vector<8x1xf32>
      %71 = vector.broadcast %70 : vector<8x1xf32> to vector<8x32xf32>
      %72 = arith.mulf %67, %71 : vector<8x32xf32>
      %73 = vector.broadcast %53 : vector<1x32xf32> to vector<8x32xf32>
      %74 = arith.mulf %72, %73 : vector<8x32xf32>
      %75 = vector.broadcast %54 : vector<1x32xf32> to vector<8x32xf32>
      %76 = arith.addf %74, %75 : vector<8x32xf32>
      %c0_61 = arith.constant 0 : index
      %c0_62 = arith.constant 0 : index
      %77 = vector.load %arg14[%c0_61, %c0_62] : memref<32x64xf32, #tpu.memory_space<vmem>>, vector<32x64xf32>
      %cst_63 = arith.constant dense<0.000000e+00> : vector<8x64xf32>
      %78 = tpu.matmul %76, %77, %cst_63 {dimension_numbers = #tpu.dot_dimension_numbers<[1], [0], [0], [1], [0, 0, 1, 1], [], []>} : vector<8x32xf32>, vector<32x64xf32>, vector<8x64xf32> -> vector<8x64xf32>
      %c0_64 = arith.constant 0 : index
      %c0_65 = arith.constant 0 : index
      %79 = vector.load %arg15[%c0_64, %c0_65] : memref<1x64xf32, #tpu.memory_space<vmem>>, vector<1x64xf32>
      %80 = vector.broadcast %79 : vector<1x64xf32> to vector<8x64xf32>
      %81 = arith.addf %78, %80 : vector<8x64xf32>
      %cst_66 = arith.constant 0.000000e+00 : f32
      %82 = vector.broadcast %cst_66 : f32 to vector<8x64xf32>
      %83 = arith.maximumf %81, %82 : vector<8x64xf32>
      %c0_67 = arith.constant 0 : index
      %c0_68 = arith.constant 0 : index
      %84 = vector.load %arg16[%c0_67, %c0_68] : memref<64x32xf32, #tpu.memory_space<vmem>>, vector<64x32xf32>
      %cst_69 = arith.constant dense<0.000000e+00> : vector<8x32xf32>
      %85 = tpu.matmul %83, %84, %cst_69 {dimension_numbers = #tpu.dot_dimension_numbers<[1], [0], [0], [1], [0, 0, 1, 1], [], []>} : vector<8x64xf32>, vector<64x32xf32>, vector<8x32xf32> -> vector<8x32xf32>
      %c0_70 = arith.constant 0 : index
      %c0_71 = arith.constant 0 : index
      %86 = vector.load %arg17[%c0_70, %c0_71] : memref<1x32xf32, #tpu.memory_space<vmem>>, vector<1x32xf32>
      %87 = vector.broadcast %86 : vector<1x32xf32> to vector<8x32xf32>
      %88 = arith.addf %85, %87 : vector<8x32xf32>
      %89 = arith.addf %76, %88 : vector<8x32xf32>
      %c0_72 = arith.constant 0 : index
      %c0_73 = arith.constant 0 : index
      %90 = vector.load %arg12[%c0_72, %c0_73] : memref<1x32xf32, #tpu.memory_space<vmem>>, vector<1x32xf32>
      %c0_74 = arith.constant 0 : index
      %c0_75 = arith.constant 0 : index
      %91 = vector.load %arg13[%c0_74, %c0_75] : memref<1x32xf32, #tpu.memory_space<vmem>>, vector<1x32xf32>
      %cst_76 = arith.constant dense<0.000000e+00> : vector<8xf32>
      %92 = vector.multi_reduction <add>, %89, %cst_76 [1] : vector<8x32xf32> to vector<8xf32>
      %93 = vector.shape_cast %92 : vector<8xf32> to vector<8x1xf32>
      %cst_77 = arith.constant 3.200000e+01 : f32
      %94 = vector.broadcast %cst_77 : f32 to vector<8x1xf32>
      %95 = arith.divf %93, %94 : vector<8x1xf32>
      %96 = vector.broadcast %95 : vector<8x1xf32> to vector<8x32xf32>
      %97 = arith.subf %89, %96 : vector<8x32xf32>
      %98 = arith.mulf %97, %97 : vector<8x32xf32>
      %cst_78 = arith.constant dense<0.000000e+00> : vector<8xf32>
      %99 = vector.multi_reduction <add>, %98, %cst_78 [1] : vector<8x32xf32> to vector<8xf32>
      %100 = vector.shape_cast %99 : vector<8xf32> to vector<8x1xf32>
      %cst_79 = arith.constant 3.200000e+01 : f32
      %101 = vector.broadcast %cst_79 : f32 to vector<8x1xf32>
      %102 = arith.divf %100, %101 : vector<8x1xf32>
      %103 = vector.broadcast %95 : vector<8x1xf32> to vector<8x32xf32>
      %104 = arith.subf %89, %103 : vector<8x32xf32>
      %cst_80 = arith.constant 9.99999974E-6 : f32
      %105 = vector.broadcast %cst_80 : f32 to vector<8x1xf32>
      %106 = arith.addf %102, %105 : vector<8x1xf32>
      %107 = math.rsqrt %106 : vector<8x1xf32>
      %108 = vector.broadcast %107 : vector<8x1xf32> to vector<8x32xf32>
      %109 = arith.mulf %104, %108 : vector<8x32xf32>
      %110 = vector.broadcast %90 : vector<1x32xf32> to vector<8x32xf32>
      %111 = arith.mulf %109, %110 : vector<8x32xf32>
      %112 = vector.broadcast %91 : vector<1x32xf32> to vector<8x32xf32>
      %113 = arith.addf %111, %112 : vector<8x32xf32>
      %c0_81 = arith.constant 0 : index
      %c0_82 = arith.constant 0 : index
      %c0_83 = arith.constant 0 : index
      %114 = vector.load %arg18[%c0_81, %c0_82, %c0_83] : memref<1x8x32xf32, #tpu.memory_space<vmem>>, vector<1x8x32xf32>
      %115 = vector.shape_cast %114 : vector<1x8x32xf32> to vector<8x32xf32>
      %116 = vector.shape_cast %113 : vector<8x32xf32> to vector<1x8x32xf32>
      tpu.vector_store %arg18[%c0_81, %c0_82, %c0_83], %116 {strides = array<i32>} : memref<1x8x32xf32, #tpu.memory_space<vmem>>, vector<1x8x32xf32>,
    } else {
    }
    return
  }
  func.func @transform_0(%arg0: i32, %arg1: i32, %arg2: i32) -> (i32, i32, i32) {
    %c0_i32 = arith.constant 0 : i32
    %c0_i32_0 = arith.constant 0 : i32
    return %arg0, %arg1, %c0_i32 : i32, i32, i32
  }
  func.func @transform_1(%arg0: i32, %arg1: i32, %arg2: i32) -> (i32, i32, i32, i32) {
    %c0_i32 = arith.constant 0 : i32
    %c0_i32_0 = arith.constant 0 : i32
    %c0_i32_1 = arith.constant 0 : i32
    return %arg0, %c0_i32, %arg1, %c0_i32_0 : i32, i32, i32, i32
  }
  func.func @transform_2(%arg0: i32, %arg1: i32, %arg2: i32) -> (i32, i32, i32, i32) {
    %c0_i32 = arith.constant 0 : i32
    %c0_i32_0 = arith.constant 0 : i32
    %c0_i32_1 = arith.constant 0 : i32
    return %arg0, %c0_i32, %c0_i32_0, %arg2 : i32, i32, i32, i32
  }
  func.func @transform_3(%arg0: i32, %arg1: i32, %arg2: i32) -> (i32, i32, i32, i32) {
    %c0_i32 = arith.constant 0 : i32
    %c0_i32_0 = arith.constant 0 : i32
    %c0_i32_1 = arith.constant 0 : i32
    return %arg0, %c0_i32, %arg2, %c0_i32_0 : i32, i32, i32, i32
  }
  func.func @transform_4(%arg0: i32, %arg1: i32, %arg2: i32) -> (i32, i32, i32) {
    %c0_i32 = arith.constant 0 : i32
    %c0_i32_0 = arith.constant 0 : i32
    return %arg0, %c0_i32, %arg2 : i32, i32, i32
  }
  func.func @transform_5(%arg0: i32, %arg1: i32, %arg2: i32) -> (i32, i32) {
    %c0_i32 = arith.constant 0 : i32
    %c0_i32_0 = arith.constant 0 : i32
    %c0_i32_1 = arith.constant 0 : i32
    return %c0_i32, %c0_i32_0 : i32, i32
  }
  func.func @transform_6(%arg0: i32, %arg1: i32, %arg2: i32) -> (i32, i32) {
    %c0_i32 = arith.constant 0 : i32
    %c0_i32_0 = arith.constant 0 : i32
    %c0_i32_1 = arith.constant 0 : i32
    return %c0_i32, %c0_i32_0 : i32, i32
  }
  func.func @transform_7(%arg0: i32, %arg1: i32, %arg2: i32) -> (i32, i32) {
    %c0_i32 = arith.constant 0 : i32
    %c0_i32_0 = arith.constant 0 : i32
    %c0_i32_1 = arith.constant 0 : i32
    return %c0_i32, %c0_i32_0 : i32, i32
  }
  func.func @transform_8(%arg0: i32, %arg1: i32, %arg2: i32) -> (i32, i32) {
    %c0_i32 = arith.constant 0 : i32
    %c0_i32_0 = arith.constant 0 : i32
    %c0_i32_1 = arith.constant 0 : i32
    return %c0_i32, %c0_i32_0 : i32, i32
  }
  func.func @transform_9(%arg0: i32, %arg1: i32, %arg2: i32) -> (i32, i32) {
    %c0_i32 = arith.constant 0 : i32
    %c0_i32_0 = arith.constant 0 : i32
    %c0_i32_1 = arith.constant 0 : i32
    return %c0_i32, %c0_i32_0 : i32, i32
  }
  func.func @transform_10(%arg0: i32, %arg1: i32, %arg2: i32) -> (i32, i32) {
    %c0_i32 = arith.constant 0 : i32
    %c0_i32_0 = arith.constant 0 : i32
    %c0_i32_1 = arith.constant 0 : i32
    return %c0_i32, %c0_i32_0 : i32, i32
  }
  func.func @transform_11(%arg0: i32, %arg1: i32, %arg2: i32) -> (i32, i32) {
    %c0_i32 = arith.constant 0 : i32
    %c0_i32_0 = arith.constant 0 : i32
    %c0_i32_1 = arith.constant 0 : i32
    return %c0_i32, %c0_i32_0 : i32, i32
  }
  func.func @transform_12(%arg0: i32, %arg1: i32, %arg2: i32) -> (i32, i32) {
    %c0_i32 = arith.constant 0 : i32
    %c0_i32_0 = arith.constant 0 : i32
    %c0_i32_1 = arith.constant 0 : i32
    return %c0_i32, %c0_i32_0 : i32, i32
  }
  func.func @transform_13(%arg0: i32, %arg1: i32, %arg2: i32) -> (i32, i32) {
    %c0_i32 = arith.constant 0 : i32
    %c0_i32_0 = arith.constant 0 : i32
    %c0_i32_1 = arith.constant 0 : i32
    return %c0_i32, %c0_i32_0 : i32, i32
  }
  func.func @transform_14(%arg0: i32, %arg1: i32, %arg2: i32) -> (i32, i32) {
    %c0_i32 = arith.constant 0 : i32
    %c0_i32_0 = arith.constant 0 : i32
    %c0_i32_1 = arith.constant 0 : i32
    return %c0_i32, %c0_i32_0 : i32, i32
  }
  func.func @transform_15(%arg0: i32, %arg1: i32, %arg2: i32) -> (i32, i32, i32) {
    %c0_i32 = arith.constant 0 : i32
    %c0_i32_0 = arith.constant 0 : i32
    return %arg0, %arg1, %c0_i32 : i32, i32, i32
  }
}

</mosaic_0001>

<llo_original>
// kernel: tpu_custom_call.1
$region0: #{tpu_custom_call.1}
  #allocation0 [shape = 'u32[]', space=smem, size = 0x4, offset = 0x4, fixed_abs, tag = 'smem constant byte address 0x4 - core index']
  #allocation1 [shape = 'u32[144,128]{1,0:T(1,128)}', space=vmem, size = 0x12000, scoped, tag = 'internal scratch']
  #allocation2 [shape = 'f32[4,8,1]{2,1,0:T(8,128)}', space=vmem, size = 0x4000, scoped, tag = 'scratch operand']
  #allocation3 [shape = 'f32[4,8,1]{2,1,0:T(8,128)}', space=vmem, size = 0x4000, scoped, tag = 'scratch operand']
  #allocation4 [shape = 'f32[4,8,8]{2,1,0:T(8,128)}', space=vmem, size = 0x4000, scoped, tag = 'scratch operand']
  %s0 = inlined_call_operand.hbm [shape: f32[2,8,32], index: 0, kind: input, shape index: {}]
  %s1 = inlined_call_operand.vmem [shape: f32[2,4,8,8], index: 1, kind: input, shape index: {}]
  %s2 = inlined_call_operand.hbm [shape: f32[2,4,8,8], index: 2, kind: input, shape index: {}]
  %s3 = inlined_call_operand.hbm [shape: f32[2,4,8,8], index: 3, kind: input, shape index: {}]
  %s4 = inlined_call_operand.vmem [shape: f32[2,1,8], index: 4, kind: input, shape index: {}]
  %s5 = inlined_call_operand.vmem [shape: f32[32,32], index: 5, kind: input, shape index: {}]
  %s6 = inlined_call_operand.vmem [shape: f32[1,32], index: 6, kind: input, shape index: {}]
  %s7 = inlined_call_operand.vmem [shape: f32[1,32], index: 7, kind: input, shape index: {}]
  %s8 = inlined_call_operand.vmem [shape: f32[1,32], index: 8, kind: input, shape index: {}]
  %s9 = inlined_call_operand.vmem [shape: f32[1,32], index: 9, kind: input, shape index: {}]
  %s10 = inlined_call_operand.vmem [shape: f32[1,32], index: 10, kind: input, shape index: {}]
  %s11 = inlined_call_operand.hbm [shape: f32[32,64], index: 11, kind: input, shape index: {}]
  %s12 = inlined_call_operand.vmem [shape: f32[1,64], index: 12, kind: input, shape index: {}]
  %s13 = inlined_call_operand.vmem [shape: f32[64,32], index: 13, kind: input, shape index: {}]
  %s14 = inlined_call_operand.vmem [shape: f32[1,32], index: 14, kind: input, shape index: {}]
  %s15 = inlined_call_operand.hbm [shape: f32[2,8,32], index: 15, kind: output, shape index: {}]
  %s16 = sld [smem:[#allocation0]]
  $region117: #{tpu_custom_call.1} parent=0
    _
  %s18 = ssub.s32 1, %s16
  %s19 = scalar_select 0, %s18, %s16
  $region1: #{tpu_custom_call.1} parent=0
    #allocation5 [shape = 'u8[8192]{0}', space=vmem, size = 0x2000, scoped, tag = 'input window, operand 0']
    #allocation6 [shape = 's32[2]{0}', space=sflag, size = 0x8, scoped, tag = 'scoped memory for tpu_custom_call.1']
    #allocation7 [shape = 's32[2]{0}', space=sflag, size = 0x8, scoped, tag = 'scoped memory for tpu_custom_call.1']
    #allocation8 [shape = 'u8[32768]{0}', space=vmem, size = 0x8000, scoped, tag = 'input window, operand 2']
    #allocation9 [shape = 's32[2]{0}', space=sflag, size = 0x8, scoped, tag = 'scoped memory for tpu_custom_call.1']
    #allocation10 [shape = 'u8[32768]{0}', space=vmem, size = 0x8000, scoped, tag = 'input window, operand 3']
    #allocation11 [shape = 'u8[16384]{0}', space=vmem, size = 0x4000, scoped, tag = 'input window, operand 11, single buffered']
    #allocation12 [shape = 's32[1]{0}', space=sflag, size = 0x4, scoped, tag = 'scoped memory for tpu_custom_call.1']
    #allocation13 [shape = 'u8[8192]{0}', space=vmem, size = 0x2000, scoped, tag = 'output window, operand 0']
    %20 = vsyncpa [#allocation6], 0
    %s21 = scalar_lea.sflag [#allocation6], 1
    %22 = vsyncpa %s21, 0
    %23 = vsyncpa [#allocation9], 0
    %s24 = scalar_lea.sflag [#allocation9], 1
    %25 = vsyncpa %s24, 0
    %26 = vsyncpa [#allocation12], 0
    %27 = vsyncpa [#allocation7], 0
    %s28 = scalar_lea.sflag [#allocation7], 1
    %29 = vsyncpa %s28, 0
    loop: start=0, step=1, limit=4
    $region2: #{tpu_custom_call.1} parent=1 // loop_pre_header
      _
    $region3: #{tpu_custom_call.1} parent=1 // loop_header
      %s31 = sphi 0, %s35
      %p32 = scmp.ge.s32.totalorder %s31, 4
      %s38 = sphi 0, %s57
      %s39 = sphi 0, %s53
      %s40 = sphi 0, %s49
      %s41 = sphi 0, %s38
      %s42 = sphi 0, %s39
      %s43 = sphi 0, %s40
      %s44 = sphi 0, %s41
      %s45 = sphi 0, %s42
      %s46 = sphi 0, %s43
      %s62 = sphi 0, %s64
      %s65 = sphi 0, %s62
      %s66 = sphi 0, %s65
      %s82 = sphi 0, %s66
      %s90 = sphi 0, %s92
      %s93 = sphi 0, %s90
      %s94 = sphi 0, %s93
      %s110 = sphi 0, %s94
      %s118 = sphi 0, %s120
      %s121 = sphi 0, %s118
      %s122 = sphi 0, %s121
      %s138 = sphi 0, %s122
      %s146 = sphi 0, %s148
      %s149 = sphi 0, %s146
      %s150 = sphi 0, %s149
      %s166 = sphi 0, %s150
      %s174 = sphi 0, %s176
      %s177 = sphi 0, %s174
      %s178 = sphi 0, %s177
      %s194 = sphi 0, %s178
      %s198 = sphi 0, %s198
      %s200 = sphi 0, %s198
      %s201 = sphi 0, %s200
      %s215 = sphi 0, %s201
      %s219 = sphi 0, %s219
      %s221 = sphi 0, %s219
      %s222 = sphi 0, %s221
      %s236 = sphi 0, %s222
      %s240 = sphi 0, %s240
      %s242 = sphi 0, %s240
      %s243 = sphi 0, %s242
      %s257 = sphi 0, %s243
      %s261 = sphi 0, %s261
      %s263 = sphi 0, %s261
      %s264 = sphi 0, %s263
      %s278 = sphi 0, %s264
      %s282 = sphi 0, %s282
      %s284 = sphi 0, %s282
      %s285 = sphi 0, %s284
      %s299 = sphi 0, %s285
      %s303 = sphi 0, %s303
      %s305 = sphi 0, %s303
      %s306 = sphi 0, %s305
      %s320 = sphi 0, %s306
      %s324 = sphi 0, %s324
      %s326 = sphi 0, %s324
      %s327 = sphi 0, %s326
      %s341 = sphi 0, %s327
      %s345 = sphi 0, %s345
      %s347 = sphi 0, %s345
      %s348 = sphi 0, %s347
      %s362 = sphi 0, %s348
      %s366 = sphi 0, %s366
      %s368 = sphi 0, %s366
      %s369 = sphi 0, %s368
      %s383 = sphi 0, %s369
      %s387 = sphi 0, %s387
      %s389 = sphi 0, %s387
      %s390 = sphi 0, %s389
      %s404 = sphi 0, %s390
      %s412 = sphi 0, %s414
      %s415 = sphi 0, %s412
      %s416 = sphi 0, %s415
      %s432 = sphi 0, %s416
    $region4: #{tpu_custom_call.1} parent=1 // loop_header_branch
      %34 = sbr.rel (%p32) target = $region8
    $region5: #{tpu_custom_call.1} parent=1 // loop_body
      %s36 = ssub.s32 %s31, 1
      %s37 = ssub.s32 %s31, 2
      %s47 = sadd.s32 1, %s40
      %p48 = scmp.ge.s32.totalorder %s47, 1
      %s49 = scalar_select %p48, 0, %s47
      %s50 = sadd.s32 1, %s39
      %s51 = scalar_select %p48, %s50, %s39
      %p52 = scmp.ge.s32.totalorder %s51, 1
      %s53 = scalar_select %p52, 0, %s51
      %s54 = sadd.s32 1, %s38
      %s55 = scalar_select %p52, %s54, %s38
      %p56 = scmp.ge.s32.totalorder %s55, 2
      %s57 = scalar_select %p56, 0, %s55
      %s58 = ssub.s32 %s38, %s57
      %s59 = ssub.s32 %s39, %s53
      %s60 = sor.u32 %s58, %s59
      %p61 = scmp.eq.s32.totalorder %s60, 0
      %s63 = sadd.s32 %s62, 1
      %s64 = scalar_select %p61, %s62, %s63
      %p67 = pneg %p61
      %p68 = scmp.eq.s32.totalorder %s31, 1
      %p69 = por %p67, %p68
      %p70 = scmp.ne.s32.totalorder %s62, %s65
      %p71 = scmp.eq.s32.totalorder %s31, 0
      %p72 = por %p70, %p71
      %p73 = scmp.ne.s32.totalorder %s62, %s65
      %p74 = scmp.eq.s32.totalorder %s36, 1
      %p75 = por %p73, %p74
      %p76 = scmp.ne.s32.totalorder %s65, %s66
      %p77 = scmp.eq.s32.totalorder %s36, 0
      %p78 = por %p76, %p77
      %p79 = scmp.ne.s32.totalorder %s65, %s66
      %p80 = scmp.eq.s32.totalorder %s37, 1
      %p81 = por %p79, %p80
      %p83 = scmp.ne.s32.totalorder %s66, %s82
      %p84 = scmp.eq.s32.totalorder %s37, 0
      %p85 = por %p83, %p84
      %s86 = ssub.s32 %s38, %s57
      %s87 = ssub.s32 %s39, %s53
      %s88 = sor.u32 %s86, %s87
      %p89 = scmp.eq.s32.totalorder %s88, 0
      %s91 = sadd.s32 %s90, 1
      %s92 = scalar_select %p89, %s90, %s91
      %p95 = pneg %p89
      %p96 = scmp.eq.s32.totalorder %s31, 1
      %p97 = por %p95, %p96
      %p98 = scmp.ne.s32.totalorder %s90, %s93
      %p99 = scmp.eq.s32.totalorder %s31, 0
      %p100 = por %p98, %p99
      %p101 = scmp.ne.s32.totalorder %s90, %s93
      %p102 = scmp.eq.s32.totalorder %s36, 1
      %p103 = por %p101, %p102
      %p104 = scmp.ne.s32.totalorder %s93, %s94
      %p105 = scmp.eq.s32.totalorder %s36, 0
      %p106 = por %p104, %p105
      %p107 = scmp.ne.s32.totalorder %s93, %s94
      %p108 = scmp.eq.s32.totalorder %s37, 1
      %p109 = por %p107, %p108
      %p111 = scmp.ne.s32.totalorder %s94, %s110
      %p112 = scmp.eq.s32.totalorder %s37, 0
      %p113 = por %p111, %p112
      %s114 = ssub.s32 %s38, %s57
      %s115 = ssub.s32 %s40, %s49
      %s116 = sor.u32 %s114, %s115
      %p117 = scmp.eq.s32.totalorder %s116, 0
      %s119 = sadd.s32 %s118, 1
      %s120 = scalar_select %p117, %s118, %s119
      %p123 = pneg %p117
      %p124 = scmp.eq.s32.totalorder %s31, 1
      %p125 = por %p123, %p124
      %p126 = scmp.ne.s32.totalorder %s118, %s121
      %p127 = scmp.eq.s32.totalorder %s31, 0
      %p128 = por %p126, %p127
      %p129 = scmp.ne.s32.totalorder %s118, %s121
      %p130 = scmp.eq.s32.totalorder %s36, 1
      %p131 = por %p129, %p130
      %p132 = scmp.ne.s32.totalorder %s121, %s122
      %p133 = scmp.eq.s32.totalorder %s36, 0
      %p134 = por %p132, %p133
      %p135 = scmp.ne.s32.totalorder %s121, %s122
      %p136 = scmp.eq.s32.totalorder %s37, 1
      %p137 = por %p135, %p136
      %p139 = scmp.ne.s32.totalorder %s122, %s138
      %p140 = scmp.eq.s32.totalorder %s37, 0
      %p141 = por %p139, %p140
      %s142 = ssub.s32 %s38, %s57
      %s143 = ssub.s32 %s40, %s49
      %s144 = sor.u32 %s142, %s143
      %p145 = scmp.eq.s32.totalorder %s144, 0
      %s147 = sadd.s32 %s146, 1
      %s148 = scalar_select %p145, %s146, %s147
      %p151 = pneg %p145
      %p152 = scmp.eq.s32.totalorder %s31, 1
      %p153 = por %p151, %p152
      %p154 = scmp.ne.s32.totalorder %s146, %s149
      %p155 = scmp.eq.s32.totalorder %s31, 0
      %p156 = por %p154, %p155
      %p157 = scmp.ne.s32.totalorder %s146, %s149
      %p158 = scmp.eq.s32.totalorder %s36, 1
      %p159 = por %p157, %p158
      %p160 = scmp.ne.s32.totalorder %s149, %s150
      %p161 = scmp.eq.s32.totalorder %s36, 0
      %p162 = por %p160, %p161
      %p163 = scmp.ne.s32.totalorder %s149, %s150
      %p164 = scmp.eq.s32.totalorder %s37, 1
      %p165 = por %p163, %p164
      %p167 = scmp.ne.s32.totalorder %s150, %s166
      %p168 = scmp.eq.s32.totalorder %s37, 0
      %p169 = por %p167, %p168
      %s170 = ssub.s32 %s38, %s57
      %s171 = ssub.s32 %s40, %s49
      %s172 = sor.u32 %s170, %s171
      %p173 = scmp.eq.s32.totalorder %s172, 0
      %s175 = sadd.s32 %s174, 1
      %s176 = scalar_select %p173, %s174, %s175
      %p179 = pneg %p173
      %p180 = scmp.eq.s32.totalorder %s31, 1
      %p181 = por %p179, %p180
      %p182 = scmp.ne.s32.totalorder %s174, %s177
      %p183 = scmp.eq.s32.totalorder %s31, 0
      %p184 = por %p182, %p183
      %p185 = scmp.ne.s32.totalorder %s174, %s177
      %p186 = scmp.eq.s32.totalorder %s36, 1
      %p187 = por %p185, %p186
      %p188 = scmp.ne.s32.totalorder %s177, %s178
      %p189 = scmp.eq.s32.totalorder %s36, 0
      %p190 = por %p188, %p189
      %p191 = scmp.ne.s32.totalorder %s177, %s178
      %p192 = scmp.eq.s32.totalorder %s37, 1
      %p193 = por %p191, %p192
      %p195 = scmp.ne.s32.totalorder %s178, %s194
      %p196 = scmp.eq.s32.totalorder %s37, 0
      %p197 = por %p195, %p196
      %s199 = sadd.s32 %s198, 1
      %p202 = scmp.eq.s32.totalorder %s31, 1
      %p203 = scmp.ne.s32.totalorder %s198, %s200
      %p204 = scmp.eq.s32.totalorder %s31, 0
      %p205 = por %p203, %p204
      %p206 = scmp.ne.s32.totalorder %s198, %s200
      %p207 = scmp.eq.s32.totalorder %s36, 1
      %p208 = por %p206, %p207
      %p209 = scmp.ne.s32.totalorder %s200, %s201
      %p210 = scmp.eq.s32.totalorder %s36, 0
      %p211 = por %p209, %p210
      %p212 = scmp.ne.s32.totalorder %s200, %s201
      %p213 = scmp.eq.s32.totalorder %s37, 1
      %p214 = por %p212, %p213
      %p216 = scmp.ne.s32.totalorder %s201, %s215
      %p217 = scmp.eq.s32.totalorder %s37, 0
      %p218 = por %p216, %p217
      %s220 = sadd.s32 %s219, 1
      %p223 = scmp.eq.s32.totalorder %s31, 1
      %p224 = scmp.ne.s32.totalorder %s219, %s221
      %p225 = scmp.eq.s32.totalorder %s31, 0
      %p226 = por %p224, %p225
      %p227 = scmp.ne.s32.totalorder %s219, %s221
      %p228 = scmp.eq.s32.totalorder %s36, 1
      %p229 = por %p227, %p228
      %p230 = scmp.ne.s32.totalorder %s221, %s222
      %p231 = scmp.eq.s32.totalorder %s36, 0
      %p232 = por %p230, %p231
      %p233 = scmp.ne.s32.totalorder %s221, %s222
      %p234 = scmp.eq.s32.totalorder %s37, 1
      %p235 = por %p233, %p234
      %p237 = scmp.ne.s32.totalorder %s222, %s236
      %p238 = scmp.eq.s32.totalorder %s37, 0
      %p239 = por %p237, %p238
      %s241 = sadd.s32 %s240, 1
      %p244 = scmp.eq.s32.totalorder %s31, 1
      %p245 = scmp.ne.s32.totalorder %s240, %s242
      %p246 = scmp.eq.s32.totalorder %s31, 0
      %p247 = por %p245, %p246
      %p248 = scmp.ne.s32.totalorder %s240, %s242
      %p249 = scmp.eq.s32.totalorder %s36, 1
      %p250 = por %p248, %p249
      %p251 = scmp.ne.s32.totalorder %s242, %s243
      %p252 = scmp.eq.s32.totalorder %s36, 0
      %p253 = por %p251, %p252
      %p254 = scmp.ne.s32.totalorder %s242, %s243
      %p255 = scmp.eq.s32.totalorder %s37, 1
      %p256 = por %p254, %p255
      %p258 = scmp.ne.s32.totalorder %s243, %s257
      %p259 = scmp.eq.s32.totalorder %s37, 0
      %p260 = por %p258, %p259
      %s262 = sadd.s32 %s261, 1
      %p265 = scmp.eq.s32.totalorder %s31, 1
      %p266 = scmp.ne.s32.totalorder %s261, %s263
      %p267 = scmp.eq.s32.totalorder %s31, 0
      %p268 = por %p266, %p267
      %p269 = scmp.ne.s32.totalorder %s261, %s263
      %p270 = scmp.eq.s32.totalorder %s36, 1
      %p271 = por %p269, %p270
      %p272 = scmp.ne.s32.totalorder %s263, %s264
      %p273 = scmp.eq.s32.totalorder %s36, 0
      %p274 = por %p272, %p273
      %p275 = scmp.ne.s32.totalorder %s263, %s264
      %p276 = scmp.eq.s32.totalorder %s37, 1
      %p277 = por %p275, %p276
      %p279 = scmp.ne.s32.totalorder %s264, %s278
      %p280 = scmp.eq.s32.totalorder %s37, 0
      %p281 = por %p279, %p280
      %s283 = sadd.s32 %s282, 1
      %p286 = scmp.eq.s32.totalorder %s31, 1
      %p287 = scmp.ne.s32.totalorder %s282, %s284
      %p288 = scmp.eq.s32.totalorder %s31, 0
      %p289 = por %p287, %p288
      %p290 = scmp.ne.s32.totalorder %s282, %s284
      %p291 = scmp.eq.s32.totalorder %s36, 1
      %p292 = por %p290, %p291
      %p293 = scmp.ne.s32.totalorder %s284, %s285
      %p294 = scmp.eq.s32.totalorder %s36, 0
      %p295 = por %p293, %p294
      %p296 = scmp.ne.s32.totalorder %s284, %s285
      %p297 = scmp.eq.s32.totalorder %s37, 1
      %p298 = por %p296, %p297
      %p300 = scmp.ne.s32.totalorder %s285, %s299
      %p301 = scmp.eq.s32.totalorder %s37, 0
      %p302 = por %p300, %p301
      %s304 = sadd.s32 %s303, 1
      %p307 = scmp.eq.s32.totalorder %s31, 1
      %p308 = scmp.ne.s32.totalorder %s303, %s305
      %p309 = scmp.eq.s32.totalorder %s31, 0
      %p310 = por %p308, %p309
      %p311 = scmp.ne.s32.totalorder %s303, %s305
      %p312 = scmp.eq.s32.totalorder %s36, 1
      %p313 = por %p311, %p312
      %p314 = scmp.ne.s32.totalorder %s305, %s306
      %p315 = scmp.eq.s32.totalorder %s36, 0
      %p316 = por %p314, %p315
      %p317 = scmp.ne.s32.totalorder %s305, %s306
      %p318 = scmp.eq.s32.totalorder %s37, 1
      %p319 = por %p317, %p318
      %p321 = scmp.ne.s32.totalorder %s306, %s320
      %p322 = scmp.eq.s32.totalorder %s37, 0
      %p323 = por %p321, %p322
      %s325 = sadd.s32 %s324, 1
      %p328 = scmp.eq.s32.totalorder %s31, 1
      %p329 = scmp.ne.s32.totalorder %s324, %s326
      %p330 = scmp.eq.s32.totalorder %s31, 0
      %p331 = por %p329, %p330
      %p332 = scmp.ne.s32.totalorder %s324, %s326
      %p333 = scmp.eq.s32.totalorder %s36, 1
      %p334 = por %p332, %p333
      %p335 = scmp.ne.s32.totalorder %s326, %s327
      %p336 = scmp.eq.s32.totalorder %s36, 0
      %p337 = por %p335, %p336
      %p338 = scmp.ne.s32.totalorder %s326, %s327
      %p339 = scmp.eq.s32.totalorder %s37, 1
      %p340 = por %p338, %p339
      %p342 = scmp.ne.s32.totalorder %s327, %s341
      %p343 = scmp.eq.s32.totalorder %s37, 0
      %p344 = por %p342, %p343
      %s346 = sadd.s32 %s345, 1
      %p349 = scmp.eq.s32.totalorder %s31, 1
      %p350 = scmp.ne.s32.totalorder %s345, %s347
      %p351 = scmp.eq.s32.totalorder %s31, 0
      %p352 = por %p350, %p351
      %p353 = scmp.ne.s32.totalorder %s345, %s347
      %p354 = scmp.eq.s32.totalorder %s36, 1
      %p355 = por %p353, %p354
      %p356 = scmp.ne.s32.totalorder %s347, %s348
      %p357 = scmp.eq.s32.totalorder %s36, 0
      %p358 = por %p356, %p357
      %p359 = scmp.ne.s32.totalorder %s347, %s348
      %p360 = scmp.eq.s32.totalorder %s37, 1
      %p361 = por %p359, %p360
      %p363 = scmp.ne.s32.totalorder %s348, %s362
      %p364 = scmp.eq.s32.totalorder %s37, 0
      %p365 = por %p363, %p364
      %s367 = sadd.s32 %s366, 1
      %p370 = scmp.eq.s32.totalorder %s31, 1
      %p371 = scmp.ne.s32.totalorder %s366, %s368
      %p372 = scmp.eq.s32.totalorder %s31, 0
      %p373 = por %p371, %p372
      %p374 = scmp.ne.s32.totalorder %s366, %s368
      %p375 = scmp.eq.s32.totalorder %s36, 1
      %p376 = por %p374, %p375
      %p377 = scmp.ne.s32.totalorder %s368, %s369
      %p378 = scmp.eq.s32.totalorder %s36, 0
      %p379 = por %p377, %p378
      %p380 = scmp.ne.s32.totalorder %s368, %s369
      %p381 = scmp.eq.s32.totalorder %s37, 1
      %p382 = por %p380, %p381
      %p384 = scmp.ne.s32.totalorder %s369, %s383
      %p385 = scmp.eq.s32.totalorder %s37, 0
      %p386 = por %p384, %p385
      %s388 = sadd.s32 %s387, 1
      %p391 = scmp.eq.s32.totalorder %s31, 1
      %p392 = scmp.ne.s32.totalorder %s387, %s389
      %p393 = scmp.eq.s32.totalorder %s31, 0
      %p394 = por %p392, %p393
      %p395 = scmp.ne.s32.totalorder %s387, %s389
      %p396 = scmp.eq.s32.totalorder %s36, 1
      %p397 = por %p395, %p396
      %p398 = scmp.ne.s32.totalorder %s389, %s390
      %p399 = scmp.eq.s32.totalorder %s36, 0
      %p400 = por %p398, %p399
      %p401 = scmp.ne.s32.totalorder %s389, %s390
      %p402 = scmp.eq.s32.totalorder %s37, 1
      %p403 = por %p401, %p402
      %p405 = scmp.ne.s32.totalorder %s390, %s404
      %p406 = scmp.eq.s32.totalorder %s37, 0
      %p407 = por %p405, %p406
      %s408 = ssub.s32 %s38, %s57
      %s409 = ssub.s32 %s39, %s53
      %s410 = sor.u32 %s408, %s409
      %p411 = scmp.eq.s32.totalorder %s410, 0
      %s413 = sadd.s32 %s412, 1
      %s414 = scalar_select %p411, %s412, %s413
      %p417 = pneg %p411
      %p418 = scmp.eq.s32.totalorder %s31, 1
      %p419 = por %p417, %p418
      %p420 = scmp.ne.s32.totalorder %s412, %s415
      %p421 = scmp.eq.s32.totalorder %s31, 0
      %p422 = por %p420, %p421
      %p423 = scmp.ne.s32.totalorder %s412, %s415
      %p424 = scmp.eq.s32.totalorder %s36, 1
      %p425 = por %p423, %p424
      %p426 = scmp.ne.s32.totalorder %s415, %s416
      %p427 = scmp.eq.s32.totalorder %s36, 0
      %p428 = por %p426, %p427
      %p429 = scmp.ne.s32.totalorder %s415, %s416
      %p430 = scmp.eq.s32.totalorder %s37, 1
      %p431 = por %p429, %p430
      %p433 = scmp.ne.s32.totalorder %s416, %s432
      %p434 = scmp.eq.s32.totalorder %s37, 0
      %p435 = por %p433, %p434
      %p436 = scmp.le.s32.totalorder 1, %s31
      %p437 = scmp.lt.s32.totalorder %s31, 3
      %p438 = pnand %p436, %p437
      %p439 = pneg %p438
      // Predicated region
      $region9: #{tpu_custom_call.1} parent=5 // pred_check
        _
      $region10: #{tpu_custom_call.1} parent=5 // pred_check_branch
        %441 = sbr.rel (%p438) target = $region12
      $region11: #{tpu_custom_call.1} parent=5 // pred_region
        %s442 = ssub.s32 %s31, 1
        // Predicated region
        $region13: #{tpu_custom_call.1} parent=11 // pred_check
          %p443 = pneg %p211
        $region14: #{tpu_custom_call.1} parent=11 // pred_check_branch
          %445 = sbr.rel (%p443) target = $region16
        $region15: #{tpu_custom_call.1} parent=11 // pred_region
          _
        $region16: #{tpu_custom_call.1} parent=11 // pred_fallthru
          _
        // Predicated region
        $region17: #{tpu_custom_call.1} parent=11 // pred_check
          %p446 = pneg %p232
        $region18: #{tpu_custom_call.1} parent=11 // pred_check_branch
          %448 = sbr.rel (%p446) target = $region20
        $region19: #{tpu_custom_call.1} parent=11 // pred_region
          _
        $region20: #{tpu_custom_call.1} parent=11 // pred_fallthru
          _
        // Predicated region
        $region21: #{tpu_custom_call.1} parent=11 // pred_check
          %p449 = pneg %p253
        $region22: #{tpu_custom_call.1} parent=11 // pred_check_branch
          %451 = sbr.rel (%p449) target = $region24
        $region23: #{tpu_custom_call.1} parent=11 // pred_region
          _
        $region24: #{tpu_custom_call.1} parent=11 // pred_fallthru
          _
        // Predicated region
        $region25: #{tpu_custom_call.1} parent=11 // pred_check
          %p452 = pneg %p274
        $region26: #{tpu_custom_call.1} parent=11 // pred_check_branch
          %454 = sbr.rel (%p452) target = $region28
        $region27: #{tpu_custom_call.1} parent=11 // pred_region
          _
        $region28: #{tpu_custom_call.1} parent=11 // pred_fallthru
          _
        // Predicated region
        $region29: #{tpu_custom_call.1} parent=11 // pred_check
          %p455 = pneg %p295
        $region30: #{tpu_custom_call.1} parent=11 // pred_check_branch
          %457 = sbr.rel (%p455) target = $region32
        $region31: #{tpu_custom_call.1} parent=11 // pred_region
          _
        $region32: #{tpu_custom_call.1} parent=11 // pred_fallthru
          _
        // Predicated region
        $region33: #{tpu_custom_call.1} parent=11 // pred_check
          %p458 = pneg %p316
        $region34: #{tpu_custom_call.1} parent=11 // pred_check_branch
          %460 = sbr.rel (%p458) target = $region36
        $region35: #{tpu_custom_call.1} parent=11 // pred_region
          _
        $region36: #{tpu_custom_call.1} parent=11 // pred_fallthru
          _
        // Predicated region
        $region37: #{tpu_custom_call.1} parent=11 // pred_check
          %p461 = pneg %p337
        $region38: #{tpu_custom_call.1} parent=11 // pred_check_branch
          %463 = sbr.rel (%p461) target = $region40
        $region39: #{tpu_custom_call.1} parent=11 // pred_region
          %s465 = ssub.s32 512, 512
          %466 = vsyncadd [#allocation12], %s465
          %s467 = sshll.u32 [#allocation11], 4
          %s468 = int_to_ptr.vmem [resolvable:$true] %s467
          %473 = dma.hbm_to_vmem [thread:$0]  %s11, 512, %s468, [#allocation12], 128, 128, 8
        $region40: #{tpu_custom_call.1} parent=11 // pred_fallthru
          _
        // Predicated region
        $region41: #{tpu_custom_call.1} parent=11 // pred_check
          %p474 = pneg %p358
        $region42: #{tpu_custom_call.1} parent=11 // pred_check_branch
          %476 = sbr.rel (%p474) target = $region44
        $region43: #{tpu_custom_call.1} parent=11 // pred_region
          _
        $region44: #{tpu_custom_call.1} parent=11 // pred_fallthru
          _
        // Predicated region
        $region45: #{tpu_custom_call.1} parent=11 // pred_check
          %p477 = pneg %p379
        $region46: #{tpu_custom_call.1} parent=11 // pred_check_branch
          %479 = sbr.rel (%p477) target = $region48
        $region47: #{tpu_custom_call.1} parent=11 // pred_region
          _
        $region48: #{tpu_custom_call.1} parent=11 // pred_fallthru
          _
        // Predicated region
        $region49: #{tpu_custom_call.1} parent=11 // pred_check
          %p480 = pneg %p400
        $region50: #{tpu_custom_call.1} parent=11 // pred_check_branch
          %482 = sbr.rel (%p480) target = $region52
        $region51: #{tpu_custom_call.1} parent=11 // pred_region
          _
        $region52: #{tpu_custom_call.1} parent=11 // pred_fallthru
          _
      $region12: #{tpu_custom_call.1} parent=5 // pred_fallthru
        _
      %p483 = scmp.lt.s32.totalorder %s31, 2
      // Predicated region
      $region53: #{tpu_custom_call.1} parent=5 // pred_check
        %p484 = pneg %p483
      $region54: #{tpu_custom_call.1} parent=5 // pred_check_branch
        %486 = sbr.rel (%p484) target = $region56
      $region55: #{tpu_custom_call.1} parent=5 // pred_region
        // Predicated region
        $region57: #{tpu_custom_call.1} parent=55 // pred_check
          %p487 = pneg %p72
        $region58: #{tpu_custom_call.1} parent=55 // pred_check_branch
          %489 = sbr.rel (%p487) target = $region60
        $region59: #{tpu_custom_call.1} parent=55 // pred_region
          %s490 = sand.u32 %s62, 1
          %s491 = scalar_lea.sflag [#allocation6], %s490
          %s492 = sand.u32 %s62, 1
          %s493 = smul.addr %s492, 8
          %s494 = scalar_lea.vmem [#allocation5], %s493
          %s496 = ssub.s32 128, 128
          %497 = vsyncadd %s491, %s496
          %s498 = sadd.s32 %s39, %s38
          %s499 = smul.addr %s498, 128
          %s500 = scalar_lea.hbm %s0, %s499
          %s502 = sshll.u32 %s494, 4
          %s503 = int_to_ptr.vmem [resolvable:$true] %s502
          %505 = dma.hbm_to_vmem [thread:$0]  %s500, 128, %s503, %s491
        $region60: #{tpu_custom_call.1} parent=55 // pred_fallthru
          _
        // Predicated region
        $region61: #{tpu_custom_call.1} parent=55 // pred_check
          %p506 = pneg %p100
        $region62: #{tpu_custom_call.1} parent=55 // pred_check_branch
          %508 = sbr.rel (%p506) target = $region64
        $region63: #{tpu_custom_call.1} parent=55 // pred_region
          %p509 = scmp.lt.s32.totalorder %s38, 1
          %s510 = scalar_select %p509, %s38, 1
          %p511 = scmp.lt.s32.totalorder %s39, 0
          %s512 = scalar_select %p511, %s39, 0
          %s513 = smul.addr %s510, 4
          %s514 = sadd.s32 %s512, %s513
          %s515 = smul.addr %s514, 8
          %s516 = scalar_lea.vmem %s1, %s515
        $region64: #{tpu_custom_call.1} parent=55 // pred_fallthru
          _
        // Predicated region
        $region65: #{tpu_custom_call.1} parent=55 // pred_check
          %p517 = pneg %p128
        $region66: #{tpu_custom_call.1} parent=55 // pred_check_branch
          %519 = sbr.rel (%p517) target = $region68
        $region67: #{tpu_custom_call.1} parent=55 // pred_region
          %s520 = sand.u32 %s31, 1
          %s521 = scalar_lea.sflag [#allocation9], %s520
          %s522 = sand.u32 %s118, 1
          %s523 = smul.addr %s522, 32
          %s524 = scalar_lea.vmem [#allocation8], %s523
          %s526 = ssub.s32 512, 512
          %527 = vsyncadd %s521, %s526
          %s528 = smul.addr %s38, 4
          %s529 = sadd.s32 %s40, %s528
          %s530 = smul.addr %s529, 128
          %s531 = scalar_lea.hbm %s2, %s530
          %s532 = sshll.u32 %s524, 4
          %s533 = int_to_ptr.vmem [resolvable:$true] %s532
          %538 = dma.hbm_to_vmem [thread:$0]  %s531, 512, %s533, %s521, 128, 128, 8
        $region68: #{tpu_custom_call.1} parent=55 // pred_fallthru
          _
        // Predicated region
        $region69: #{tpu_custom_call.1} parent=55 // pred_check
          %p539 = pneg %p156
        $region70: #{tpu_custom_call.1} parent=55 // pred_check_branch
          %541 = sbr.rel (%p539) target = $region72
        $region71: #{tpu_custom_call.1} parent=55 // pred_region
          %s542 = sand.u32 %s31, 1
          %s543 = scalar_lea.sflag [#allocation9], %s542
          %s544 = sand.u32 %s146, 1
          %s545 = smul.addr %s544, 32
          %s546 = scalar_lea.vmem [#allocation10], %s545
          %s548 = ssub.s32 512, 512
          %549 = vsyncadd %s543, %s548
          %s550 = smul.addr %s38, 4
          %s551 = sadd.s32 %s40, %s550
          %s552 = smul.addr %s551, 128
          %s553 = scalar_lea.hbm %s3, %s552
          %s554 = sshll.u32 %s546, 4
          %s555 = int_to_ptr.vmem [resolvable:$true] %s554
          %560 = dma.hbm_to_vmem [thread:$0]  %s553, 512, %s555, %s543, 128, 128, 8
        $region72: #{tpu_custom_call.1} parent=55 // pred_fallthru
          _
        // Predicated region
        $region73: #{tpu_custom_call.1} parent=55 // pred_check
          %p561 = pneg %p184
        $region74: #{tpu_custom_call.1} parent=55 // pred_check_branch
          %563 = sbr.rel (%p561) target = $region76
        $region75: #{tpu_custom_call.1} parent=55 // pred_region
          %p564 = scmp.lt.s32.totalorder %s38, 1
          %s565 = scalar_select %p564, %s38, 1
          %p566 = scmp.lt.s32.totalorder %s40, 0
          %s567 = scalar_select %p566, %s40, 0
          %s568 = sadd.s32 %s567, %s565
          %s569 = scalar_lea.vmem %s4, %s568
        $region76: #{tpu_custom_call.1} parent=55 // pred_fallthru
          _
      $region56: #{tpu_custom_call.1} parent=5 // pred_fallthru
        _
      %p570 = scmp.le.s32.totalorder 1, %s31
      %p571 = scmp.lt.s32.totalorder %s31, 3
      %p572 = pnand %p570, %p571
      %p573 = pneg %p572
      // Predicated region
      $region77: #{tpu_custom_call.1} parent=5 // pred_check
        _
      $region78: #{tpu_custom_call.1} parent=5 // pred_check_branch
        %575 = sbr.rel (%p572) target = $region80
      $region79: #{tpu_custom_call.1} parent=5 // pred_region
        %s576 = ssub.s32 %s31, 1
        %s577 = sand.u32 %s65, 1
        %s578 = scalar_lea.sflag [#allocation6], %s577
        %s579 = sand.u32 %s65, 1
        %s580 = smul.addr %s579, 8
        %s581 = scalar_lea.vmem [#allocation5], %s580
        // Predicated region
        $region81: #{tpu_custom_call.1} parent=79 // pred_check
          %p582 = pneg %p78
        $region82: #{tpu_custom_call.1} parent=79 // pred_check_branch
          %584 = sbr.rel (%p582) target = $region84
        $region83: #{tpu_custom_call.1} parent=79 // pred_region
          %585 = dma.done %s578, 128
        $region84: #{tpu_custom_call.1} parent=79 // pred_fallthru
          _
        %s586 = sand.u32 %s36, 1
        %s587 = scalar_lea.sflag [#allocation9], %s586
        %s588 = sand.u32 %s121, 1
        %s589 = smul.addr %s588, 32
        %s590 = scalar_lea.vmem [#allocation8], %s589
        // Predicated region
        $region85: #{tpu_custom_call.1} parent=79 // pred_check
          %p591 = pneg %p134
        $region86: #{tpu_custom_call.1} parent=79 // pred_check_branch
          %593 = sbr.rel (%p591) target = $region88
        $region87: #{tpu_custom_call.1} parent=79 // pred_region
          %594 = dma.done %s587, 512
        $region88: #{tpu_custom_call.1} parent=79 // pred_fallthru
          _
        %s595 = sand.u32 %s36, 1
        %s596 = scalar_lea.sflag [#allocation9], %s595
        %s597 = sand.u32 %s149, 1
        %s598 = smul.addr %s597, 32
        %s599 = scalar_lea.vmem [#allocation10], %s598
        // Predicated region
        $region89: #{tpu_custom_call.1} parent=79 // pred_check
          %p600 = pneg %p162
        $region90: #{tpu_custom_call.1} parent=79 // pred_check_branch
          %602 = sbr.rel (%p600) target = $region92
        $region91: #{tpu_custom_call.1} parent=79 // pred_region
          %603 = dma.done %s596, 512
        $region92: #{tpu_custom_call.1} parent=79 // pred_fallthru
          _
        // Predicated region
        $region93: #{tpu_custom_call.1} parent=79 // pred_check
          %p604 = pneg %p337
        $region94: #{tpu_custom_call.1} parent=79 // pred_check_branch
          %606 = sbr.rel (%p604) target = $region96
        $region95: #{tpu_custom_call.1} parent=79 // pred_region
          %607 = dma.done [#allocation12], 512
        $region96: #{tpu_custom_call.1} parent=79 // pred_fallthru
          _
        %s608 = sand.u32 %s65, 1
        %s609 = scalar_lea.sflag [#allocation6], %s608
        %s610 = sand.u32 %s65, 1
        %s611 = smul.addr %s610, 8
        %s612 = scalar_lea.vmem [#allocation5], %s611
        %p613 = pneg %p78
        %p614 = pneg %p75
        %p615 = scmp.lt.s32.totalorder %s41, 1
        %s616 = scalar_select %p615, %s41, 1
        %p617 = scmp.lt.s32.totalorder %s42, 0
        %s618 = scalar_select %p617, %s42, 0
        %s619 = smul.addr %s616, 4
        %s620 = sadd.s32 %s618, %s619
        %s621 = smul.addr %s620, 8
        %s622 = scalar_lea.vmem %s1, %s621
        %p623 = pneg %p106
        %p624 = pneg %p103
        %s625 = sand.u32 %s36, 1
        %s626 = scalar_lea.sflag [#allocation9], %s625
        %s627 = sand.u32 %s121, 1
        %s628 = smul.addr %s627, 32
        %s629 = scalar_lea.vmem [#allocation8], %s628
        %p630 = pneg %p134
        %p631 = pneg %p131
        %s632 = sand.u32 %s36, 1
        %s633 = scalar_lea.sflag [#allocation9], %s632
        %s634 = sand.u32 %s149, 1
        %s635 = smul.addr %s634, 32
        %s636 = scalar_lea.vmem [#allocation10], %s635
        %p637 = pneg %p162
        %p638 = pneg %p159
        %p639 = scmp.lt.s32.totalorder %s41, 1
        %s640 = scalar_select %p639, %s41, 1
        %p641 = scmp.lt.s32.totalorder %s43, 0
        %s642 = scalar_select %p641, %s43, 0
        %s643 = sadd.s32 %s642, %s640
        %s644 = scalar_lea.vmem %s4, %s643
        %p645 = pneg %p190
        %p646 = pneg %p187
        %p647 = pneg %p211
        %p648 = pneg %p208
        %p649 = pneg %p232
        %p650 = pneg %p229
        %p651 = pneg %p253
        %p652 = pneg %p250
        %p653 = pneg %p274
        %p654 = pneg %p271
        %p655 = pneg %p295
        %p656 = pneg %p292
        %p657 = pneg %p316
        %p658 = pneg %p313
        %p659 = pneg %p337
        %p660 = pneg %p334
        %p661 = pneg %p358
        %p662 = pneg %p355
        %p663 = pneg %p379
        %p664 = pneg %p376
        %p665 = pneg %p400
        %p666 = pneg %p397
        %p667 = pneg %p428
        %p668 = pneg %p425
        %s669 = sand.u32 %s415, 1
        %s670 = scalar_lea.sflag [#allocation7], %s669
        %s671 = sand.u32 %s415, 1
        %s672 = smul.addr %s671, 8
        %s673 = scalar_lea.vmem [#allocation13], %s672
        %p674 = scmp.lt.s32.totalorder %s41, 1
        %s675 = scalar_select %p674, %s41, 1
        %p676 = scmp.lt.s32.totalorder %s42, 0
        %s677 = scalar_select %p676, %s42, 0
        %s678 = smul.addr %s675, 4
        %s679 = sadd.s32 %s677, %s678
        %s680 = smul.addr %s679, 8
        %s681 = scalar_lea.vmem %s1, %s680
        %p682 = scmp.lt.s32.totalorder %s41, 1
        %s683 = scalar_select %p682, %s41, 1
        %p684 = scmp.lt.s32.totalorder %s43, 0
        %s685 = scalar_select %p684, %s43, 0
        %s686 = sadd.s32 %s685, %s683
        %s687 = scalar_lea.vmem %s4, %s686
        %p688 = scmp.eq.s32.totalorder %s43, 0
        // Predicated region
        $region97: #{tpu_custom_call.1} parent=79 // pred_check
          %p689 = pneg %p688
        $region98: #{tpu_custom_call.1} parent=79 // pred_check_branch
          %691 = sbr.rel (%p689) target = $region100
        $region99: #{tpu_custom_call.1} parent=79 // pred_region
          %vm692 = vcmask 7168
          %693 = vst.msk [vmem:[#allocation2] sm:$0xff] %vm692, -inf
          %694 = vst.msk [vmem:[#allocation2 + $0x8] sm:$0xff] %vm692, -inf
          %695 = vst.msk [vmem:[#allocation2 + $0x10] sm:$0xff] %vm692, -inf
          %696 = vst.msk [vmem:[#allocation2 + $0x18] sm:$0xff] %vm692, -inf
          %697 = vst.msk [vmem:[#allocation3] sm:$0xff] %vm692, 0.0
          %698 = vst.msk [vmem:[#allocation3 + $0x8] sm:$0xff] %vm692, 0.0
          %699 = vst.msk [vmem:[#allocation3 + $0x10] sm:$0xff] %vm692, 0.0
          %700 = vst.msk [vmem:[#allocation3 + $0x18] sm:$0xff] %vm692, 0.0
          %vm701 = vcmask 64512
          %702 = vst.msk [vmem:[#allocation4] sm:$0xff] %vm701, 0.0
          %703 = vst.msk [vmem:[#allocation4 + $0x8] sm:$0xff] %vm701, 0.0
          %704 = vst.msk [vmem:[#allocation4 + $0x10] sm:$0xff] %vm701, 0.0
          %705 = vst.msk [vmem:[#allocation4 + $0x18] sm:$0xff] %vm701, 0.0
        $region100: #{tpu_custom_call.1} parent=79 // pred_fallthru
          _
        %v706 = vld [vmem:[%s681] sm:$0xff]
        %v707 = vld [vmem:[%s681 + $0x8] sm:$0xff]
        %v708 = vld [vmem:[%s681 + $0x10] sm:$0xff]
        %v709 = vld [vmem:[%s681 + $0x18] sm:$0xff]
        %v710 = vld [vmem:[%s590] sm:$0xff]
        %v711 = vld [vmem:[%s590 + $0x8] sm:$0xff]
        %v712 = vld [vmem:[%s590 + $0x10] sm:$0xff]
        %v713 = vld [vmem:[%s590 + $0x18] sm:$0xff]
        %v714 = vld [vmem:[%s599] sm:$0xff]
        %v715 = vld [vmem:[%s599 + $0x8] sm:$0xff]
        %v716 = vld [vmem:[%s599 + $0x10] sm:$0xff]
        %v717 = vld [vmem:[%s599 + $0x18] sm:$0xff]
        %v718 = vld [vmem:[%s687] sm:$0x1]
        %v720 = vlaneseq
        %v721 = vshrl.u32 %v720, 7
        %v722 = vsub.s32 0, %v721
        %v723 = vrot.slane %v718, %v722
        %vm725 = vcmask 64512
        %v727 = vsel %vm725, %v706, 0
        %729 = vmatprep.subr.mxu0 0.0
        %730 = vmatpush1.msra.mxu0 %v710
        %731 = vmatprep.subr.mxu0 0.0
        %732 = vmatpush1.msra.mxu0 0.0
        %733 = vmatprep.subr.mxu0 0.0
        %734 = vmatpush1.msra.mxu0 0.0
        %735 = vmatprep.subr.mxu0 0.0
        %736 = vmatpush1.msra.mxu0 0.0
        %737 = vmatprep.subr.mxu0 0.0
        %738 = vmatpush1.msra.mxu0 0.0
        %739 = vmatprep.subr.mxu0 0.0
        %740 = vmatpush1.msra.mxu0 0.0
        %741 = vmatprep.subr.mxu0 0.0
        %742 = vmatpush1.msra.mxu0 0.0
        %743 = vmatprep.subr.mxu0 0.0
        %744 = vmatpush1.msra.mxu0 0.0
        %745 = vmatprep.subr.mxu0 0.0
        %746 = vmatpush1.msra.mxu0 0.0
        %747 = vmatprep.subr.mxu0 0.0
        %748 = vmatpush1.msra.mxu0 0.0
        %749 = vmatprep.subr.mxu0 0.0
        %750 = vmatpush1.msra.mxu0 0.0
        %751 = vmatprep.subr.mxu0 0.0
        %752 = vmatpush1.msra.mxu0 0.0
        %753 = vmatprep.subr.mxu0 0.0
        %754 = vmatpush1.msra.mxu0 0.0
        %755 = vmatprep.subr.mxu0 0.0
        %756 = vmatpush1.msra.mxu0 0.0
        %757 = vmatprep.subr.mxu0 0.0
        %758 = vmatpush1.msra.mxu0 0.0
        %759 = vmatprep.subr.mxu0 0.0
        %760 = vmatpush1.msra.mxu0 0.0
        %761 = vmatprep.subr.mxu0 0.0
        %762 = vmatpush1.msra.mxu0 0.0
        %763 = vmatprep.subr.mxu0 0.0
        %764 = vmatpush1.msra.mxu0 0.0
        %765 = vmatprep.subr.mxu0 0.0
        %766 = vmatpush1.msra.mxu0 0.0
        %767 = vmatprep.subr.mxu0 0.0
        %768 = vmatpush1.msra.mxu0 0.0
        %769 = vmatprep.subr.mxu0 0.0
        %770 = vmatpush1.msra.mxu0 0.0
        %771 = vmatprep.subr.mxu0 0.0
        %772 = vmatpush1.msra.mxu0 0.0
        %773 = vmatprep.subr.mxu0 0.0
        %774 = vmatpush1.msra.mxu0 0.0
        %775 = vmatprep.subr.mxu0 0.0
        %776 = vmatpush1.msra.mxu0 0.0
        %777 = vmatprep.subr.mxu0 0.0
        %778 = vmatpush1.msra.mxu0 0.0
        %779 = vmatprep.subr.mxu0 0.0
        %780 = vmatpush1.msra.mxu0 0.0
        %781 = vmatprep.subr.mxu0 0.0
        %782 = vmatpush1.msra.mxu0 0.0
        %783 = vmatprep.subr.mxu0 0.0
        %784 = vmatpush1.msra.mxu0 0.0
        %785 = vmatprep.subr.mxu0 0.0
        %786 = vmatpush1.msra.mxu0 0.0
        %787 = vmatprep.subr.mxu0 0.0
        %788 = vmatpush1.msra.mxu0 0.0
        %789 = vmatprep.subr.mxu0 0.0
        %790 = vmatpush1.msra.mxu0 0.0
        %791 = vmatprep.subr.mxu0 0.0
        %792 = vmatpush1.msra.mxu0 0.0
        %793 = vmatprep.mubr.f32.mxu0 0.0
        %794 = vmatmul.mubr.f32.gmra.mrb[0].mxu0 %v727
        %v795 = vpop.f32.mrb[0].mxu0
        %v796 = vadd.f32 %v723, %v795
        %v797 = vpop.f32.mrb[0].mxu0
        %798 = vdwg.mxu0
        %v800 = vsel %vm725, %v707, 0
        %802 = vmatprep.subr.mxu0 0.0
        %803 = vmatpush1.msra.mxu0 %v711
        %804 = vmatprep.subr.mxu0 0.0
        %805 = vmatpush1.msra.mxu0 0.0
        %806 = vmatprep.subr.mxu0 0.0
        %807 = vmatpush1.msra.mxu0 0.0
        %808 = vmatprep.subr.mxu0 0.0
        %809 = vmatpush1.msra.mxu0 0.0
        %810 = vmatprep.subr.mxu0 0.0
        %811 = vmatpush1.msra.mxu0 0.0
        %812 = vmatprep.subr.mxu0 0.0
        %813 = vmatpush1.msra.mxu0 0.0
        %814 = vmatprep.subr.mxu0 0.0
        %815 = vmatpush1.msra.mxu0 0.0
        %816 = vmatprep.subr.mxu0 0.0
        %817 = vmatpush1.msra.mxu0 0.0
        %818 = vmatprep.subr.mxu0 0.0
        %819 = vmatpush1.msra.mxu0 0.0
        %820 = vmatprep.subr.mxu0 0.0
        %821 = vmatpush1.msra.mxu0 0.0
        %822 = vmatprep.subr.mxu0 0.0
        %823 = vmatpush1.msra.mxu0 0.0
        %824 = vmatprep.subr.mxu0 0.0
        %825 = vmatpush1.msra.mxu0 0.0
        %826 = vmatprep.subr.mxu0 0.0
        %827 = vmatpush1.msra.mxu0 0.0
        %828 = vmatprep.subr.mxu0 0.0
        %829 = vmatpush1.msra.mxu0 0.0
        %830 = vmatprep.subr.mxu0 0.0
        %831 = vmatpush1.msra.mxu0 0.0
        %832 = vmatprep.subr.mxu0 0.0
        %833 = vmatpush1.msra.mxu0 0.0
        %834 = vmatprep.subr.mxu0 0.0
        %835 = vmatpush1.msra.mxu0 0.0
        %836 = vmatprep.subr.mxu0 0.0
        %837 = vmatpush1.msra.mxu0 0.0
        %838 = vmatprep.subr.mxu0 0.0
        %839 = vmatpush1.msra.mxu0 0.0
        %840 = vmatprep.subr.mxu0 0.0
        %841 = vmatpush1.msra.mxu0 0.0
        %842 = vmatprep.subr.mxu0 0.0
        %843 = vmatpush1.msra.mxu0 0.0
        %844 = vmatprep.subr.mxu0 0.0
        %845 = vmatpush1.msra.mxu0 0.0
        %846 = vmatprep.subr.mxu0 0.0
        %847 = vmatpush1.msra.mxu0 0.0
        %848 = vmatprep.subr.mxu0 0.0
        %849 = vmatpush1.msra.mxu0 0.0
        %850 = vmatprep.subr.mxu0 0.0
        %851 = vmatpush1.msra.mxu0 0.0
        %852 = vmatprep.subr.mxu0 0.0
        %853 = vmatpush1.msra.mxu0 0.0
        %854 = vmatprep.subr.mxu0 0.0
        %855 = vmatpush1.msra.mxu0 0.0
        %856 = vmatprep.subr.mxu0 0.0
        %857 = vmatpush1.msra.mxu0 0.0
        %858 = vmatprep.subr.mxu0 0.0
        %859 = vmatpush1.msra.mxu0 0.0
        %860 = vmatprep.subr.mxu0 0.0
        %861 = vmatpush1.msra.mxu0 0.0
        %862 = vmatprep.subr.mxu0 0.0
        %863 = vmatpush1.msra.mxu0 0.0
        %864 = vmatprep.subr.mxu0 0.0
        %865 = vmatpush1.msra.mxu0 0.0
        %866 = vmatprep.mubr.f32.mxu0 0.0
        %867 = vmatmul.mubr.f32.gmra.mrb[0].mxu0 %v800
        %v868 = vpop.f32.mrb[0].mxu0
        %v869 = vadd.f32 %v723, %v868
        %v870 = vpop.f32.mrb[0].mxu0
        %871 = vdwg.mxu0
        %v873 = vsel %vm725, %v708, 0
        %875 = vmatprep.subr.mxu0 0.0
        %876 = vmatpush1.msra.mxu0 %v712
        %877 = vmatprep.subr.mxu0 0.0
        %878 = vmatpush1.msra.mxu0 0.0
        %879 = vmatprep.subr.mxu0 0.0
        %880 = vmatpush1.msra.mxu0 0.0
        %881 = vmatprep.subr.mxu0 0.0
        %882 = vmatpush1.msra.mxu0 0.0
        %883 = vmatprep.subr.mxu0 0.0
        %884 = vmatpush1.msra.mxu0 0.0
        %885 = vmatprep.subr.mxu0 0.0
        %886 = vmatpush1.msra.mxu0 0.0
        %887 = vmatprep.subr.mxu0 0.0
        %888 = vmatpush1.msra.mxu0 0.0
        %889 = vmatprep.subr.mxu0 0.0
        %890 = vmatpush1.msra.mxu0 0.0
        %891 = vmatprep.subr.mxu0 0.0
        %892 = vmatpush1.msra.mxu0 0.0
        %893 = vmatprep.subr.mxu0 0.0
        %894 = vmatpush1.msra.mxu0 0.0
        %895 = vmatprep.subr.mxu0 0.0
        %896 = vmatpush1.msra.mxu0 0.0
        %897 = vmatprep.subr.mxu0 0.0
        %898 = vmatpush1.msra.mxu0 0.0
        %899 = vmatprep.subr.mxu0 0.0
        %900 = vmatpush1.msra.mxu0 0.0
        %901 = vmatprep.subr.mxu0 0.0
        %902 = vmatpush1.msra.mxu0 0.0
        %903 = vmatprep.subr.mxu0 0.0
        %904 = vmatpush1.msra.mxu0 0.0
        %905 = vmatprep.subr.mxu0 0.0
        %906 = vmatpush1.msra.mxu0 0.0
        %907 = vmatprep.subr.mxu0 0.0
        %908 = vmatpush1.msra.mxu0 0.0
        %909 = vmatprep.subr.mxu0 0.0
        %910 = vmatpush1.msra.mxu0 0.0
        %911 = vmatprep.subr.mxu0 0.0
        %912 = vmatpush1.msra.mxu0 0.0
        %913 = vmatprep.subr.mxu0 0.0
        %914 = vmatpush1.msra.mxu0 0.0
        %915 = vmatprep.subr.mxu0 0.0
        %916 = vmatpush1.msra.mxu0 0.0
        %917 = vmatprep.subr.mxu0 0.0
        %918 = vmatpush1.msra.mxu0 0.0
        %919 = vmatprep.subr.mxu0 0.0
        %920 = vmatpush1.msra.mxu0 0.0
        %921 = vmatprep.subr.mxu0 0.0
        %922 = vmatpush1.msra.mxu0 0.0
        %923 = vmatprep.subr.mxu0 0.0
        %924 = vmatpush1.msra.mxu0 0.0
        %925 = vmatprep.subr.mxu0 0.0
        %926 = vmatpush1.msra.mxu0 0.0
        %927 = vmatprep.subr.mxu0 0.0
        %928 = vmatpush1.msra.mxu0 0.0
        %929 = vmatprep.subr.mxu0 0.0
        %930 = vmatpush1.msra.mxu0 0.0
        %931 = vmatprep.subr.mxu0 0.0
        %932 = vmatpush1.msra.mxu0 0.0
        %933 = vmatprep.subr.mxu0 0.0
        %934 = vmatpush1.msra.mxu0 0.0
        %935 = vmatprep.subr.mxu0 0.0
        %936 = vmatpush1.msra.mxu0 0.0
        %937 = vmatprep.subr.mxu0 0.0
        %938 = vmatpush1.msra.mxu0 0.0
        %939 = vmatprep.mubr.f32.mxu0 0.0
        %940 = vmatmul.mubr.f32.gmra.mrb[0].mxu0 %v873
        %v941 = vpop.f32.mrb[0].mxu0
        %v942 = vadd.f32 %v723, %v941
        %v943 = vpop.f32.mrb[0].mxu0
        %944 = vdwg.mxu0
        %v946 = vsel %vm725, %v709, 0
        %948 = vmatprep.subr.mxu0 0.0
        %949 = vmatpush1.msra.mxu0 %v713
        %950 = vmatprep.subr.mxu0 0.0
        %951 = vmatpush1.msra.mxu0 0.0
        %952 = vmatprep.subr.mxu0 0.0
        %953 = vmatpush1.msra.mxu0 0.0
        %954 = vmatprep.subr.mxu0 0.0
        %955 = vmatpush1.msra.mxu0 0.0
        %956 = vmatprep.subr.mxu0 0.0
        %957 = vmatpush1.msra.mxu0 0.0
        %958 = vmatprep.subr.mxu0 0.0
        %959 = vmatpush1.msra.mxu0 0.0
        %960 = vmatprep.subr.mxu0 0.0
        %961 = vmatpush1.msra.mxu0 0.0
        %962 = vmatprep.subr.mxu0 0.0
        %963 = vmatpush1.msra.mxu0 0.0
        %964 = vmatprep.subr.mxu0 0.0
        %965 = vmatpush1.msra.mxu0 0.0
        %966 = vmatprep.subr.mxu0 0.0
        %967 = vmatpush1.msra.mxu0 0.0
        %968 = vmatprep.subr.mxu0 0.0
        %969 = vmatpush1.msra.mxu0 0.0
        %970 = vmatprep.subr.mxu0 0.0
        %971 = vmatpush1.msra.mxu0 0.0
        %972 = vmatprep.subr.mxu0 0.0
        %973 = vmatpush1.msra.mxu0 0.0
        %974 = vmatprep.subr.mxu0 0.0
        %975 = vmatpush1.msra.mxu0 0.0
        %976 = vmatprep.subr.mxu0 0.0
        %977 = vmatpush1.msra.mxu0 0.0
        %978 = vmatprep.subr.mxu0 0.0
        %979 = vmatpush1.msra.mxu0 0.0
        %980 = vmatprep.subr.mxu0 0.0
        %981 = vmatpush1.msra.mxu0 0.0
        %982 = vmatprep.subr.mxu0 0.0
        %983 = vmatpush1.msra.mxu0 0.0
        %984 = vmatprep.subr.mxu0 0.0
        %985 = vmatpush1.msra.mxu0 0.0
        %986 = vmatprep.subr.mxu0 0.0
        %987 = vmatpush1.msra.mxu0 0.0
        %988 = vmatprep.subr.mxu0 0.0
        %989 = vmatpush1.msra.mxu0 0.0
        %990 = vmatprep.subr.mxu0 0.0
        %991 = vmatpush1.msra.mxu0 0.0
        %992 = vmatprep.subr.mxu0 0.0
        %993 = vmatpush1.msra.mxu0 0.0
        %994 = vmatprep.subr.mxu0 0.0
        %995 = vmatpush1.msra.mxu0 0.0
        %996 = vmatprep.subr.mxu0 0.0
        %997 = vmatpush1.msra.mxu0 0.0
        %998 = vmatprep.subr.mxu0 0.0
        %999 = vmatpush1.msra.mxu0 0.0
        %1000 = vmatprep.subr.mxu0 0.0
        %1001 = vmatpush1.msra.mxu0 0.0
        %1002 = vmatprep.subr.mxu0 0.0
        %1003 = vmatpush1.msra.mxu0 0.0
        %1004 = vmatprep.subr.mxu0 0.0
        %1005 = vmatpush1.msra.mxu0 0.0
        %1006 = vmatprep.subr.mxu0 0.0
        %1007 = vmatpush1.msra.mxu0 0.0
        %1008 = vmatprep.subr.mxu0 0.0
        %1009 = vmatpush1.msra.mxu0 0.0
        %1010 = vmatprep.subr.mxu0 0.0
        %1011 = vmatpush1.msra.mxu0 0.0
        %1012 = vmatprep.mubr.f32.mxu0 0.0
        %1013 = vmatmul.mubr.f32.gmra.mrb[0].mxu0 %v946
        %v1014 = vpop.f32.mrb[0].mxu0
        %v1015 = vadd.f32 %v723, %v1014
        %v1016 = vpop.f32.mrb[0].mxu0
        %1017 = vdwg.mxu0
        %v1018 = vld [vmem:[#allocation2] sm:$0xff]
        %v1019 = vld [vmem:[#allocation2 + $0x8] sm:$0xff]
        %v1020 = vld [vmem:[#allocation2 + $0x10] sm:$0xff]
        %v1021 = vld [vmem:[#allocation2 + $0x18] sm:$0xff]
        %v1022 = vsel %vm725, %v796, -inf
        %1023 = vmax.xlane.f32.xlu0 %v1022
        %v1024 = vpop.xlane.xlu0 %1023
        %v1025 = vsel %vm725, %v869, -inf
        %1026 = vmax.xlane.f32.xlu0 %v1025
        %v1027 = vpop.xlane.xlu0 %1026
        %v1028 = vsel %vm725, %v942, -inf
        %1029 = vmax.xlane.f32.xlu0 %v1028
        %v1030 = vpop.xlane.xlu0 %1029
        %v1031 = vsel %vm725, %v1015, -inf
        %1032 = vmax.xlane.f32.xlu0 %v1031
        %v1033 = vpop.xlane.xlu0 %1032
        %v1034 = vmax.f32 %v1018, %v1024
        %v1035 = vmax.f32 %v1019, %v1027
        %v1036 = vmax.f32 %v1020, %v1030
        %v1037 = vmax.f32 %v1021, %v1033
        %v1038 = vsub.f32 %v1018, %v1034
        %v1039 = vsub.f32 %v1019, %v1035
        %v1040 = vsub.f32 %v1020, %v1036
        %v1041 = vsub.f32 %v1021, %v1037
        %v1042 = vmul.f32 %v1038, 1.442695
        %v1043 = vpow.pop %v1042
        %v1044 = vmul.f32 %v1039, 1.442695
        %v1045 = vpow.pop %v1044
        %v1046 = vmul.f32 %v1040, 1.442695
        %v1047 = vpow.pop %v1046
        %v1048 = vmul.f32 %v1041, 1.442695
        %v1049 = vpow.pop %v1048
        %1051 = vset.pattern.permute.xlu0 0
        %1052 = vperm.xlu0 %1051, %v1034
        %v1053 = vpop.permute.xlu0 %1052
        %1056 = vset.pattern.permute.xlu0 0
        %1057 = vperm.xlu0 %1056, %v1035
        %v1058 = vpop.permute.xlu0 %1057
        %1061 = vset.pattern.permute.xlu0 0
        %1062 = vperm.xlu0 %1061, %v1036
        %v1063 = vpop.permute.xlu0 %1062
        %1066 = vset.pattern.permute.xlu0 0
        %1067 = vperm.xlu0 %1066, %v1037
        %v1068 = vpop.permute.xlu0 %1067
        %v1070 = vsub.f32 %v796, %v1053
        %v1071 = vsub.f32 %v869, %v1058
        %v1072 = vsub.f32 %v942, %v1063
        %v1073 = vsub.f32 %v1015, %v1068
        %v1074 = vmul.f32 %v1070, 1.442695
        %v1075 = vpow.pop %v1074
        %v1076 = vmul.f32 %v1071, 1.442695
        %v1077 = vpow.pop %v1076
        %v1078 = vmul.f32 %v1072, 1.442695
        %v1079 = vpow.pop %v1078
        %v1080 = vmul.f32 %v1073, 1.442695
        %v1081 = vpow.pop %v1080
        %v1082 = vld [vmem:[#allocation3] sm:$0xff]
        %v1083 = vld [vmem:[#allocation3 + $0x8] sm:$0xff]
        %v1084 = vld [vmem:[#allocation3 + $0x10] sm:$0xff]
        %v1085 = vld [vmem:[#allocation3 + $0x18] sm:$0xff]
        %v1086 = vmul.f32 %v1043, %v1082
        %v1087 = vmul.f32 %v1045, %v1083
        %v1088 = vmul.f32 %v1047, %v1084
        %v1089 = vmul.f32 %v1049, %v1085
        %v1090 = vsel %vm725, %v1075, 0.0
        %1091 = vadd.xlane.f32.xlu0 %v1090
        %v1092 = vpop.xlane.xlu0 %1091
        %v1093 = vsel %vm725, %v1077, 0.0
        %1094 = vadd.xlane.f32.xlu0 %v1093
        %v1095 = vpop.xlane.xlu0 %1094
        %v1096 = vsel %vm725, %v1079, 0.0
        %1097 = vadd.xlane.f32.xlu0 %v1096
        %v1098 = vpop.xlane.xlu0 %1097
        %v1099 = vsel %vm725, %v1081, 0.0
        %1100 = vadd.xlane.f32.xlu0 %v1099
        %v1101 = vpop.xlane.xlu0 %1100
        %v1102 = vadd.f32 %v1086, %v1092
        %v1103 = vadd.f32 %v1087, %v1095
        %v1104 = vadd.f32 %v1088, %v1098
        %v1105 = vadd.f32 %v1089, %v1101
        %vm1106 = vcmask 7168
        %1107 = vst.msk [vmem:[#allocation3] sm:$0xff] %vm1106, %v1102
        %1108 = vst.msk [vmem:[#allocation3 + $0x8] sm:$0xff] %vm1106, %v1103
        %1109 = vst.msk [vmem:[#allocation3 + $0x10] sm:$0xff] %vm1106, %v1104
        %1110 = vst.msk [vmem:[#allocation3 + $0x18] sm:$0xff] %vm1106, %v1105
        %v1112 = vsel %vm725, %v1075, 0
        %1114 = vmatprep.subr.mxu0 0.0
        %1115 = vmatpush1.msra.mxu0 %v714
        %1116 = vmatprep.subr.mxu0 0.0
        %1117 = vmatpush1.msra.mxu0 0.0
        %1118 = vmatprep.subr.mxu0 0.0
        %1119 = vmatpush1.msra.mxu0 0.0
        %1120 = vmatprep.subr.mxu0 0.0
        %1121 = vmatpush1.msra.mxu0 0.0
        %1122 = vmatprep.subr.mxu0 0.0
        %1123 = vmatpush1.msra.mxu0 0.0
        %1124 = vmatprep.subr.mxu0 0.0
        %1125 = vmatpush1.msra.mxu0 0.0
        %1126 = vmatprep.subr.mxu0 0.0
        %1127 = vmatpush1.msra.mxu0 0.0
        %1128 = vmatprep.subr.mxu0 0.0
        %1129 = vmatpush1.msra.mxu0 0.0
        %1130 = vmatprep.subr.mxu0 0.0
        %1131 = vmatpush1.msra.mxu0 0.0
        %1132 = vmatprep.subr.mxu0 0.0
        %1133 = vmatpush1.msra.mxu0 0.0
        %1134 = vmatprep.subr.mxu0 0.0
        %1135 = vmatpush1.msra.mxu0 0.0
        %1136 = vmatprep.subr.mxu0 0.0
        %1137 = vmatpush1.msra.mxu0 0.0
        %1138 = vmatprep.subr.mxu0 0.0
        %1139 = vmatpush1.msra.mxu0 0.0
        %1140 = vmatprep.subr.mxu0 0.0
        %1141 = vmatpush1.msra.mxu0 0.0
        %1142 = vmatprep.subr.mxu0 0.0
        %1143 = vmatpush1.msra.mxu0 0.0
        %1144 = vmatprep.subr.mxu0 0.0
        %1145 = vmatpush1.msra.mxu0 0.0
        %1146 = vmatprep.subr.mxu0 0.0
        %1147 = vmatpush1.msra.mxu0 0.0
        %1148 = vmatprep.subr.mxu0 0.0
        %1149 = vmatpush1.msra.mxu0 0.0
        %1150 = vmatprep.subr.mxu0 0.0
        %1151 = vmatpush1.msra.mxu0 0.0
        %1152 = vmatprep.subr.mxu0 0.0
        %1153 = vmatpush1.msra.mxu0 0.0
        %1154 = vmatprep.subr.mxu0 0.0
        %1155 = vmatpush1.msra.mxu0 0.0
        %1156 = vmatprep.subr.mxu0 0.0
        %1157 = vmatpush1.msra.mxu0 0.0
        %1158 = vmatprep.subr.mxu0 0.0
        %1159 = vmatpush1.msra.mxu0 0.0
        %1160 = vmatprep.subr.mxu0 0.0
        %1161 = vmatpush1.msra.mxu0 0.0
        %1162 = vmatprep.subr.mxu0 0.0
        %1163 = vmatpush1.msra.mxu0 0.0
        %1164 = vmatprep.subr.mxu0 0.0
        %1165 = vmatpush1.msra.mxu0 0.0
        %1166 = vmatprep.subr.mxu0 0.0
        %1167 = vmatpush1.msra.mxu0 0.0
        %1168 = vmatprep.subr.mxu0 0.0
        %1169 = vmatpush1.msra.mxu0 0.0
        %1170 = vmatprep.subr.mxu0 0.0
        %1171 = vmatpush1.msra.mxu0 0.0
        %1172 = vmatprep.subr.mxu0 0.0
        %1173 = vmatpush1.msra.mxu0 0.0
        %1174 = vmatprep.subr.mxu0 0.0
        %1175 = vmatpush1.msra.mxu0 0.0
        %1176 = vmatprep.subr.mxu0 0.0
        %1177 = vmatpush1.msra.mxu0 0.0
        %1178 = vmatprep.mubr.f32.mxu0 0.0
        %1179 = vmatmul.mubr.f32.gmra.mrb[0].mxu0 %v1112
        %v1180 = vpop.f32.mrb[0].mxu0
        %v1181 = vadd.f32 0.0, %v1180
        %v1182 = vpop.f32.mrb[0].mxu0
        %1183 = vdwg.mxu0
        %v1185 = vsel %vm725, %v1077, 0
        %1187 = vmatprep.subr.mxu0 0.0
        %1188 = vmatpush1.msra.mxu0 %v715
        %1189 = vmatprep.subr.mxu0 0.0
        %1190 = vmatpush1.msra.mxu0 0.0
        %1191 = vmatprep.subr.mxu0 0.0
        %1192 = vmatpush1.msra.mxu0 0.0
        %1193 = vmatprep.subr.mxu0 0.0
        %1194 = vmatpush1.msra.mxu0 0.0
        %1195 = vmatprep.subr.mxu0 0.0
        %1196 = vmatpush1.msra.mxu0 0.0
        %1197 = vmatprep.subr.mxu0 0.0
        %1198 = vmatpush1.msra.mxu0 0.0
        %1199 = vmatprep.subr.mxu0 0.0
        %1200 = vmatpush1.msra.mxu0 0.0
        %1201 = vmatprep.subr.mxu0 0.0
        %1202 = vmatpush1.msra.mxu0 0.0
        %1203 = vmatprep.subr.mxu0 0.0
        %1204 = vmatpush1.msra.mxu0 0.0
        %1205 = vmatprep.subr.mxu0 0.0
        %1206 = vmatpush1.msra.mxu0 0.0
        %1207 = vmatprep.subr.mxu0 0.0
        %1208 = vmatpush1.msra.mxu0 0.0
        %1209 = vmatprep.subr.mxu0 0.0
        %1210 = vmatpush1.msra.mxu0 0.0
        %1211 = vmatprep.subr.mxu0 0.0
        %1212 = vmatpush1.msra.mxu0 0.0
        %1213 = vmatprep.subr.mxu0 0.0
        %1214 = vmatpush1.msra.mxu0 0.0
        %1215 = vmatprep.subr.mxu0 0.0
        %1216 = vmatpush1.msra.mxu0 0.0
        %1217 = vmatprep.subr.mxu0 0.0
        %1218 = vmatpush1.msra.mxu0 0.0
        %1219 = vmatprep.subr.mxu0 0.0
        %1220 = vmatpush1.msra.mxu0 0.0
        %1221 = vmatprep.subr.mxu0 0.0
        %1222 = vmatpush1.msra.mxu0 0.0
        %1223 = vmatprep.subr.mxu0 0.0
        %1224 = vmatpush1.msra.mxu0 0.0
        %1225 = vmatprep.subr.mxu0 0.0
        %1226 = vmatpush1.msra.mxu0 0.0
        %1227 = vmatprep.subr.mxu0 0.0
        %1228 = vmatpush1.msra.mxu0 0.0
        %1229 = vmatprep.subr.mxu0 0.0
        %1230 = vmatpush1.msra.mxu0 0.0
        %1231 = vmatprep.subr.mxu0 0.0
        %1232 = vmatpush1.msra.mxu0 0.0
        %1233 = vmatprep.subr.mxu0 0.0
        %1234 = vmatpush1.msra.mxu0 0.0
        %1235 = vmatprep.subr.mxu0 0.0
        %1236 = vmatpush1.msra.mxu0 0.0
        %1237 = vmatprep.subr.mxu0 0.0
        %1238 = vmatpush1.msra.mxu0 0.0
        %1239 = vmatprep.subr.mxu0 0.0
        %1240 = vmatpush1.msra.mxu0 0.0
        %1241 = vmatprep.subr.mxu0 0.0
        %1242 = vmatpush1.msra.mxu0 0.0
        %1243 = vmatprep.subr.mxu0 0.0
        %1244 = vmatpush1.msra.mxu0 0.0
        %1245 = vmatprep.subr.mxu0 0.0
        %1246 = vmatpush1.msra.mxu0 0.0
        %1247 = vmatprep.subr.mxu0 0.0
        %1248 = vmatpush1.msra.mxu0 0.0
        %1249 = vmatprep.subr.mxu0 0.0
        %1250 = vmatpush1.msra.mxu0 0.0
        %1251 = vmatprep.mubr.f32.mxu0 0.0
        %1252 = vmatmul.mubr.f32.gmra.mrb[0].mxu0 %v1185
        %v1253 = vpop.f32.mrb[0].mxu0
        %v1254 = vadd.f32 0.0, %v1253
        %v1255 = vpop.f32.mrb[0].mxu0
        %1256 = vdwg.mxu0
        %v1258 = vsel %vm725, %v1079, 0
        %1260 = vmatprep.subr.mxu0 0.0
        %1261 = vmatpush1.msra.mxu0 %v716
        %1262 = vmatprep.subr.mxu0 0.0
        %1263 = vmatpush1.msra.mxu0 0.0
        %1264 = vmatprep.subr.mxu0 0.0
        %1265 = vmatpush1.msra.mxu0 0.0
        %1266 = vmatprep.subr.mxu0 0.0
        %1267 = vmatpush1.msra.mxu0 0.0
        %1268 = vmatprep.subr.mxu0 0.0
        %1269 = vmatpush1.msra.mxu0 0.0
        %1270 = vmatprep.subr.mxu0 0.0
        %1271 = vmatpush1.msra.mxu0 0.0
        %1272 = vmatprep.subr.mxu0 0.0
        %1273 = vmatpush1.msra.mxu0 0.0
        %1274 = vmatprep.subr.mxu0 0.0
        %1275 = vmatpush1.msra.mxu0 0.0
        %1276 = vmatprep.subr.mxu0 0.0
        %1277 = vmatpush1.msra.mxu0 0.0
        %1278 = vmatprep.subr.mxu0 0.0
        %1279 = vmatpush1.msra.mxu0 0.0
        %1280 = vmatprep.subr.mxu0 0.0
        %1281 = vmatpush1.msra.mxu0 0.0
        %1282 = vmatprep.subr.mxu0 0.0
        %1283 = vmatpush1.msra.mxu0 0.0
        %1284 = vmatprep.subr.mxu0 0.0
        %1285 = vmatpush1.msra.mxu0 0.0
        %1286 = vmatprep.subr.mxu0 0.0
        %1287 = vmatpush1.msra.mxu0 0.0
        %1288 = vmatprep.subr.mxu0 0.0
        %1289 = vmatpush1.msra.mxu0 0.0
        %1290 = vmatprep.subr.mxu0 0.0
        %1291 = vmatpush1.msra.mxu0 0.0
        %1292 = vmatprep.subr.mxu0 0.0
        %1293 = vmatpush1.msra.mxu0 0.0
        %1294 = vmatprep.subr.mxu0 0.0
        %1295 = vmatpush1.msra.mxu0 0.0
        %1296 = vmatprep.subr.mxu0 0.0
        %1297 = vmatpush1.msra.mxu0 0.0
        %1298 = vmatprep.subr.mxu0 0.0
        %1299 = vmatpush1.msra.mxu0 0.0
        %1300 = vmatprep.subr.mxu0 0.0
        %1301 = vmatpush1.msra.mxu0 0.0
        %1302 = vmatprep.subr.mxu0 0.0
        %1303 = vmatpush1.msra.mxu0 0.0
        %1304 = vmatprep.subr.mxu0 0.0
        %1305 = vmatpush1.msra.mxu0 0.0
        %1306 = vmatprep.subr.mxu0 0.0
        %1307 = vmatpush1.msra.mxu0 0.0
        %1308 = vmatprep.subr.mxu0 0.0
        %1309 = vmatpush1.msra.mxu0 0.0
        %1310 = vmatprep.subr.mxu0 0.0
        %1311 = vmatpush1.msra.mxu0 0.0
        %1312 = vmatprep.subr.mxu0 0.0
        %1313 = vmatpush1.msra.mxu0 0.0
        %1314 = vmatprep.subr.mxu0 0.0
        %1315 = vmatpush1.msra.mxu0 0.0
        %1316 = vmatprep.subr.mxu0 0.0
        %1317 = vmatpush1.msra.mxu0 0.0
        %1318 = vmatprep.subr.mxu0 0.0
        %1319 = vmatpush1.msra.mxu0 0.0
        %1320 = vmatprep.subr.mxu0 0.0
        %1321 = vmatpush1.msra.mxu0 0.0
        %1322 = vmatprep.subr.mxu0 0.0
        %1323 = vmatpush1.msra.mxu0 0.0
        %1324 = vmatprep.mubr.f32.mxu0 0.0
        %1325 = vmatmul.mubr.f32.gmra.mrb[0].mxu0 %v1258
        %v1326 = vpop.f32.mrb[0].mxu0
        %v1327 = vadd.f32 0.0, %v1326
        %v1328 = vpop.f32.mrb[0].mxu0
        %1329 = vdwg.mxu0
        %v1331 = vsel %vm725, %v1081, 0
        %1333 = vmatprep.subr.mxu0 0.0
        %1334 = vmatpush1.msra.mxu0 %v717
        %1335 = vmatprep.subr.mxu0 0.0
        %1336 = vmatpush1.msra.mxu0 0.0
        %1337 = vmatprep.subr.mxu0 0.0
        %1338 = vmatpush1.msra.mxu0 0.0
        %1339 = vmatprep.subr.mxu0 0.0
        %1340 = vmatpush1.msra.mxu0 0.0
        %1341 = vmatprep.subr.mxu0 0.0
        %1342 = vmatpush1.msra.mxu0 0.0
        %1343 = vmatprep.subr.mxu0 0.0
        %1344 = vmatpush1.msra.mxu0 0.0
        %1345 = vmatprep.subr.mxu0 0.0
        %1346 = vmatpush1.msra.mxu0 0.0
        %1347 = vmatprep.subr.mxu0 0.0
        %1348 = vmatpush1.msra.mxu0 0.0
        %1349 = vmatprep.subr.mxu0 0.0
        %1350 = vmatpush1.msra.mxu0 0.0
        %1351 = vmatprep.subr.mxu0 0.0
        %1352 = vmatpush1.msra.mxu0 0.0
        %1353 = vmatprep.subr.mxu0 0.0
        %1354 = vmatpush1.msra.mxu0 0.0
        %1355 = vmatprep.subr.mxu0 0.0
        %1356 = vmatpush1.msra.mxu0 0.0
        %1357 = vmatprep.subr.mxu0 0.0
        %1358 = vmatpush1.msra.mxu0 0.0
        %1359 = vmatprep.subr.mxu0 0.0
        %1360 = vmatpush1.msra.mxu0 0.0
        %1361 = vmatprep.subr.mxu0 0.0
        %1362 = vmatpush1.msra.mxu0 0.0
        %1363 = vmatprep.subr.mxu0 0.0
        %1364 = vmatpush1.msra.mxu0 0.0
        %1365 = vmatprep.subr.mxu0 0.0
        %1366 = vmatpush1.msra.mxu0 0.0
        %1367 = vmatprep.subr.mxu0 0.0
        %1368 = vmatpush1.msra.mxu0 0.0
        %1369 = vmatprep.subr.mxu0 0.0
        %1370 = vmatpush1.msra.mxu0 0.0
        %1371 = vmatprep.subr.mxu0 0.0
        %1372 = vmatpush1.msra.mxu0 0.0
        %1373 = vmatprep.subr.mxu0 0.0
        %1374 = vmatpush1.msra.mxu0 0.0
        %1375 = vmatprep.subr.mxu0 0.0
        %1376 = vmatpush1.msra.mxu0 0.0
        %1377 = vmatprep.subr.mxu0 0.0
        %1378 = vmatpush1.msra.mxu0 0.0
        %1379 = vmatprep.subr.mxu0 0.0
        %1380 = vmatpush1.msra.mxu0 0.0
        %1381 = vmatprep.subr.mxu0 0.0
        %1382 = vmatpush1.msra.mxu0 0.0
        %1383 = vmatprep.subr.mxu0 0.0
        %1384 = vmatpush1.msra.mxu0 0.0
        %1385 = vmatprep.subr.mxu0 0.0
        %1386 = vmatpush1.msra.mxu0 0.0
        %1387 = vmatprep.subr.mxu0 0.0
        %1388 = vmatpush1.msra.mxu0 0.0
        %1389 = vmatprep.subr.mxu0 0.0
        %1390 = vmatpush1.msra.mxu0 0.0
        %1391 = vmatprep.subr.mxu0 0.0
        %1392 = vmatpush1.msra.mxu0 0.0
        %1393 = vmatprep.subr.mxu0 0.0
        %1394 = vmatpush1.msra.mxu0 0.0
        %1395 = vmatprep.subr.mxu0 0.0
        %1396 = vmatpush1.msra.mxu0 0.0
        %1397 = vmatprep.mubr.f32.mxu0 0.0
        %1398 = vmatmul.mubr.f32.gmra.mrb[0].mxu0 %v1331
        %v1399 = vpop.f32.mrb[0].mxu0
        %v1400 = vadd.f32 0.0, %v1399
        %v1401 = vpop.f32.mrb[0].mxu0
        %1402 = vdwg.mxu0
        %v1403 = vld [vmem:[#allocation4] sm:$0xff]
        %v1404 = vld [vmem:[#allocation4 + $0x8] sm:$0xff]
        %v1405 = vld [vmem:[#allocation4 + $0x10] sm:$0xff]
        %v1406 = vld [vmem:[#allocation4 + $0x18] sm:$0xff]
        %1408 = vset.pattern.permute.xlu0 0
        %1409 = vperm.xlu0 %1408, %v1043
        %v1410 = vpop.permute.xlu0 %1409
        %1413 = vset.pattern.permute.xlu0 0
        %1414 = vperm.xlu0 %1413, %v1045
        %v1415 = vpop.permute.xlu0 %1414
        %1418 = vset.pattern.permute.xlu0 0
        %1419 = vperm.xlu0 %1418, %v1047
        %v1420 = vpop.permute.xlu0 %1419
        %1423 = vset.pattern.permute.xlu0 0
        %1424 = vperm.xlu0 %1423, %v1049
        %v1425 = vpop.permute.xlu0 %1424
        %v1427 = vmul.f32 %v1410, %v1403
        %v1428 = vmul.f32 %v1415, %v1404
        %v1429 = vmul.f32 %v1420, %v1405
        %v1430 = vmul.f32 %v1425, %v1406
        %v1431 = vadd.f32 %v1427, %v1181
        %v1432 = vadd.f32 %v1428, %v1254
        %v1433 = vadd.f32 %v1429, %v1327
        %v1434 = vadd.f32 %v1430, %v1400
        %1435 = vst.msk [vmem:[#allocation4] sm:$0xff] %vm725, %v1431
        %1436 = vst.msk [vmem:[#allocation4 + $0x8] sm:$0xff] %vm725, %v1432
        %1437 = vst.msk [vmem:[#allocation4 + $0x10] sm:$0xff] %vm725, %v1433
        %1438 = vst.msk [vmem:[#allocation4 + $0x18] sm:$0xff] %vm725, %v1434
        %1439 = vst.msk [vmem:[#allocation2] sm:$0xff] %vm1106, %v1034
        %1440 = vst.msk [vmem:[#allocation2 + $0x8] sm:$0xff] %vm1106, %v1035
        %1441 = vst.msk [vmem:[#allocation2 + $0x10] sm:$0xff] %vm1106, %v1036
        %1442 = vst.msk [vmem:[#allocation2 + $0x18] sm:$0xff] %vm1106, %v1037
        // Predicated region
        $region101: #{tpu_custom_call.1} parent=79 // pred_check
          %p1443 = pneg %p688
        $region102: #{tpu_custom_call.1} parent=79 // pred_check_branch
          %1445 = sbr.rel (%p1443) target = $region104
        $region103: #{tpu_custom_call.1} parent=79 // pred_region
          %v1446 = vld [vmem:[#allocation3] sm:$0xff]
          %v1447 = vld [vmem:[#allocation3 + $0x8] sm:$0xff]
          %v1448 = vld [vmem:[#allocation3 + $0x10] sm:$0xff]
          %v1449 = vld [vmem:[#allocation3 + $0x18] sm:$0xff]
          %v1450 = vrcp.pop %v1446
          %v1451 = vrcp.pop %v1447
          %v1452 = vrcp.pop %v1448
          %v1453 = vrcp.pop %v1449
          %v1454 = vld [vmem:[#allocation4] sm:$0xff]
          %v1455 = vld [vmem:[#allocation4 + $0x8] sm:$0xff]
          %v1456 = vld [vmem:[#allocation4 + $0x10] sm:$0xff]
          %v1457 = vld [vmem:[#allocation4 + $0x18] sm:$0xff]
          %1459 = vset.pattern.permute.xlu0 0
          %1460 = vperm.xlu0 %1459, %v1450
          %v1461 = vpop.permute.xlu0 %1460
          %1464 = vset.pattern.permute.xlu0 0
          %1465 = vperm.xlu0 %1464, %v1451
          %v1466 = vpop.permute.xlu0 %1465
          %1469 = vset.pattern.permute.xlu0 0
          %1470 = vperm.xlu0 %1469, %v1452
          %v1471 = vpop.permute.xlu0 %1470
          %1474 = vset.pattern.permute.xlu0 0
          %1475 = vperm.xlu0 %1474, %v1453
          %v1476 = vpop.permute.xlu0 %1475
          %v1478 = vmul.f32 %v1454, %v1461
          %v1479 = vmul.f32 %v1455, %v1466
          %v1480 = vmul.f32 %v1456, %v1471
          %v1481 = vmul.f32 %v1457, %v1476
          %v1482 = vcombine.low %v1478, %v1480
          %v1483 = vcombine.high %v1478, %v1480
          %v1485 = vunpack.c.l.s4 1983009808
          %v1486 = vunpack.c.0.s8 %v1485
          %v1487 = vlaneseq
          %v1488 = vshrl.u32 %v1487, 7
          %v1489 = vsub.s32 %v1486, %v1488
          %v1490 = vrot.slane %v1482, %v1489
          %v1492 = vunpack.c.l.s4 1983009808
          %v1493 = vunpack.c.0.s8 %v1492
          %v1494 = vlaneseq
          %v1495 = vshrl.u32 %v1494, 7
          %v1496 = vsub.s32 %v1493, %v1495
          %v1497 = vrot.slane %v1483, %v1496
          %v1498 = vcombine.low %v1479, %v1481
          %v1499 = vcombine.high %v1479, %v1481
          %v1501 = vunpack.c.l.s4 1983009808
          %v1502 = vunpack.c.0.s8 %v1501
          %v1503 = vlaneseq
          %v1504 = vshrl.u32 %v1503, 7
          %v1505 = vsub.s32 %v1502, %v1504
          %v1506 = vrot.slane %v1498, %v1505
          %v1508 = vunpack.c.l.s4 1983009808
          %v1509 = vunpack.c.0.s8 %v1508
          %v1510 = vlaneseq
          %v1511 = vshrl.u32 %v1510, 7
          %v1512 = vsub.s32 %v1509, %v1511
          %v1513 = vrot.slane %v1499, %v1512
          %v1514 = vcombine.low %v1490, %v1506
          %v1515 = vcombine.high %v1490, %v1506
          %v1517 = vunpack.c.l.s4 1934713408
          %v1518 = vunpack.c.0.s8 %v1517
          %v1519 = vlaneseq
          %v1520 = vshrl.u32 %v1519, 7
          %v1521 = vsub.s32 %v1518, %v1520
          %v1522 = vrot.slane %v1514, %v1521
          %v1524 = vunpack.c.l.s4 1934713408
          %v1525 = vunpack.c.0.s8 %v1524
          %v1526 = vlaneseq
          %v1527 = vshrl.u32 %v1526, 7
          %v1528 = vsub.s32 %v1525, %v1527
          %v1529 = vrot.slane %v1515, %v1528
          %v1530 = vcombine.low %v1497, %v1513
          %v1531 = vcombine.high %v1497, %v1513
          %v1533 = vunpack.c.l.s4 1934713408
          %v1534 = vunpack.c.0.s8 %v1533
          %v1535 = vlaneseq
          %v1536 = vshrl.u32 %v1535, 7
          %v1537 = vsub.s32 %v1534, %v1536
          %v1538 = vrot.slane %v1530, %v1537
          %v1540 = vunpack.c.l.s4 1934713408
          %v1541 = vunpack.c.0.s8 %v1540
          %v1542 = vlaneseq
          %v1543 = vshrl.u32 %v1542, 7
          %v1544 = vsub.s32 %v1541, %v1543
          %v1545 = vrot.slane %v1531, %v1544
          %v1546 = vcombine.high %v1522, 0.0
          %v1547 = vcombine.high %v1529, 0.0
          %v1548 = vcombine.high %v1538, 0.0
          %v1549 = vcombine.high %v1545, 0.0
          %v1550 = vcombine.low %v1522, %v1529
          %v1552 = vunpack.c.l.s4 1983009808
          %v1553 = vunpack.c.0.s8 %v1552
          %v1554 = vlaneseq
          %v1555 = vshrl.u32 %v1554, 7
          %v1556 = vsub.s32 %v1553, %v1555
          %v1557 = vrot.slane %v1550, %v1556
          %v1558 = vcombine.low %v1546, %v1547
          %v1560 = vunpack.c.l.s4 1983009808
          %v1561 = vunpack.c.0.s8 %v1560
          %v1562 = vlaneseq
          %v1563 = vshrl.u32 %v1562, 7
          %v1564 = vsub.s32 %v1561, %v1563
          %v1565 = vrot.slane %v1558, %v1564
          %v1566 = vcombine.low %v1538, %v1545
          %v1568 = vunpack.c.l.s4 1983009808
          %v1569 = vunpack.c.0.s8 %v1568
          %v1570 = vlaneseq
          %v1571 = vshrl.u32 %v1570, 7
          %v1572 = vsub.s32 %v1569, %v1571
          %v1573 = vrot.slane %v1566, %v1572
          %v1574 = vcombine.low %v1548, %v1549
          %v1576 = vunpack.c.l.s4 1983009808
          %v1577 = vunpack.c.0.s8 %v1576
          %v1578 = vlaneseq
          %v1579 = vshrl.u32 %v1578, 7
          %v1580 = vsub.s32 %v1577, %v1579
          %v1581 = vrot.slane %v1574, %v1580
          %v1582 = vcombine.low %v1557, %v1565
          %v1583 = vcombine.high %v1557, %v1565
          %v1585 = vunpack.c.l.s4 1934713408
          %v1586 = vunpack.c.0.s8 %v1585
          %v1587 = vlaneseq
          %v1588 = vshrl.u32 %v1587, 7
          %v1589 = vsub.s32 %v1586, %v1588
          %v1590 = vrot.slane %v1582, %v1589
          %v1592 = vunpack.c.l.s4 1934713408
          %v1593 = vunpack.c.0.s8 %v1592
          %v1594 = vlaneseq
          %v1595 = vshrl.u32 %v1594, 7
          %v1596 = vsub.s32 %v1593, %v1595
          %v1597 = vrot.slane %v1583, %v1596
          %v1598 = vcombine.low %v1573, %v1581
          %v1599 = vcombine.high %v1573, %v1581
          %v1601 = vunpack.c.l.s4 1934713408
          %v1602 = vunpack.c.0.s8 %v1601
          %v1603 = vlaneseq
          %v1604 = vshrl.u32 %v1603, 7
          %v1605 = vsub.s32 %v1602, %v1604
          %v1606 = vrot.slane %v1598, %v1605
          %v1608 = vunpack.c.l.s4 1934713408
          %v1609 = vunpack.c.0.s8 %v1608
          %v1610 = vlaneseq
          %v1611 = vshrl.u32 %v1610, 7
          %v1612 = vsub.s32 %v1609, %v1611
          %v1613 = vrot.slane %v1599, %v1612
          %v1614 = vcombine.low %v1590, %v1606
          %v1615 = vcombine.high %v1590, %v1606
          %v1616 = vcombine.low %v1597, %v1613
          %v1617 = vcombine.high %v1597, %v1613
          %1619 = vrot.lane.b32.xlu0 %v1615, 8
          %v1620 = vpop.permute.xlu0 %1619
          %1623 = vrot.lane.b32.xlu0 %v1616, 16
          %v1624 = vpop.permute.xlu0 %1623
          %1627 = vrot.lane.b32.xlu0 %v1617, 24
          %v1628 = vpop.permute.xlu0 %1627
          %v1630 = vsel %vm725, %v1614, %v1620
          %vm1631 = vcmask 130048
          %v1632 = vsel %vm1631, %v1630, %v1624
          %vm1633 = vcmask 195584
          %v1634 = vsel %vm1633, %v1632, %v1628
          %v1635 = vld [vmem:[%s5] sm:$0xff]
          %v1636 = vld [vmem:[%s5 + $0x8] sm:$0xff]
          %v1637 = vld [vmem:[%s5 + $0x10] sm:$0xff]
          %v1638 = vld [vmem:[%s5 + $0x18] sm:$0xff]
          %v1639 = vld [vmem:[%s6] sm:$0x1]
          %v1641 = vlaneseq
          %v1642 = vshrl.u32 %v1641, 7
          %v1643 = vsub.s32 0, %v1642
          %v1644 = vrot.slane %v1639, %v1643
          %vm1646 = vcmask 261120
          %v1648 = vsel %vm1646, %v1634, 0
          %1650 = vmatprep.subr.mxu0 0.0
          %1651 = vmatpush1.msra.mxu0 %v1635
          %1652 = vmatprep.subr.mxu0 0.0
          %1653 = vmatpush1.msra.mxu0 %v1636
          %1654 = vmatprep.subr.mxu0 0.0
          %1655 = vmatpush1.msra.mxu0 %v1637
          %1656 = vmatprep.subr.mxu0 0.0
          %1657 = vmatpush1.msra.mxu0 %v1638
          %1658 = vmatprep.subr.mxu0 0.0
          %1659 = vmatpush1.msra.mxu0 0.0
          %1660 = vmatprep.subr.mxu0 0.0
          %1661 = vmatpush1.msra.mxu0 0.0
          %1662 = vmatprep.subr.mxu0 0.0
          %1663 = vmatpush1.msra.mxu0 0.0
          %1664 = vmatprep.subr.mxu0 0.0
          %1665 = vmatpush1.msra.mxu0 0.0
          %1666 = vmatprep.subr.mxu0 0.0
          %1667 = vmatpush1.msra.mxu0 0.0
          %1668 = vmatprep.subr.mxu0 0.0
          %1669 = vmatpush1.msra.mxu0 0.0
          %1670 = vmatprep.subr.mxu0 0.0
          %1671 = vmatpush1.msra.mxu0 0.0
          %1672 = vmatprep.subr.mxu0 0.0
          %1673 = vmatpush1.msra.mxu0 0.0
          %1674 = vmatprep.subr.mxu0 0.0
          %1675 = vmatpush1.msra.mxu0 0.0
          %1676 = vmatprep.subr.mxu0 0.0
          %1677 = vmatpush1.msra.mxu0 0.0
          %1678 = vmatprep.subr.mxu0 0.0
          %1679 = vmatpush1.msra.mxu0 0.0
          %1680 = vmatprep.subr.mxu0 0.0
          %1681 = vmatpush1.msra.mxu0 0.0
          %1682 = vmatprep.subr.mxu0 0.0
          %1683 = vmatpush1.msra.mxu0 0.0
          %1684 = vmatprep.subr.mxu0 0.0
          %1685 = vmatpush1.msra.mxu0 0.0
          %1686 = vmatprep.subr.mxu0 0.0
          %1687 = vmatpush1.msra.mxu0 0.0
          %1688 = vmatprep.subr.mxu0 0.0
          %1689 = vmatpush1.msra.mxu0 0.0
          %1690 = vmatprep.subr.mxu0 0.0
          %1691 = vmatpush1.msra.mxu0 0.0
          %1692 = vmatprep.subr.mxu0 0.0
          %1693 = vmatpush1.msra.mxu0 0.0
          %1694 = vmatprep.subr.mxu0 0.0
          %1695 = vmatpush1.msra.mxu0 0.0
          %1696 = vmatprep.subr.mxu0 0.0
          %1697 = vmatpush1.msra.mxu0 0.0
          %1698 = vmatprep.subr.mxu0 0.0
          %1699 = vmatpush1.msra.mxu0 0.0
          %1700 = vmatprep.subr.mxu0 0.0
          %1701 = vmatpush1.msra.mxu0 0.0
          %1702 = vmatprep.subr.mxu0 0.0
          %1703 = vmatpush1.msra.mxu0 0.0
          %1704 = vmatprep.subr.mxu0 0.0
          %1705 = vmatpush1.msra.mxu0 0.0
          %1706 = vmatprep.subr.mxu0 0.0
          %1707 = vmatpush1.msra.mxu0 0.0
          %1708 = vmatprep.subr.mxu0 0.0
          %1709 = vmatpush1.msra.mxu0 0.0
          %1710 = vmatprep.subr.mxu0 0.0
          %1711 = vmatpush1.msra.mxu0 0.0
          %1712 = vmatprep.subr.mxu0 0.0
          %1713 = vmatpush1.msra.mxu0 0.0
          %1714 = vmatprep.mubr.f32.mxu0 0.0
          %1715 = vmatmul.mubr.f32.gmra.mrb[0].mxu0 %v1648
          %v1716 = vpop.f32.mrb[0].mxu0
          %v1717 = vadd.f32 %v1644, %v1716
          %v1718 = vpop.f32.mrb[0].mxu0
          %1719 = vdwg.mxu0
          %v1720 = vld [vmem:[%s581] sm:$0xff]
          %v1721 = vadd.f32 %v1720, %v1717
          %v1722 = vld [vmem:[%s7] sm:$0x1]
          %v1723 = vld [vmem:[%s8] sm:$0x1]
          %v1724 = vsel %vm1646, %v1721, 0.0
          %1725 = vadd.xlane.f32.xlu0 %v1724
          %v1726 = vpop.xlane.xlu0 %1725
          %v1727 = vrcp.pop 32.0
          %v1728 = vmul.f32 %v1726, %v1727
          %v1729 = vsub.f32 %v1721, %v1728
          %v1730 = vmul.f32 %v1729, %v1729
          %v1731 = vsel %vm1646, %v1730, 0.0
          %1732 = vadd.xlane.f32.xlu0 %v1731
          %v1733 = vpop.xlane.xlu0 %1732
          %v1734 = vmul.f32 %v1733, %v1727
          %v1735 = vadd.f32 %v1734, 1e-05
          %v1736 = vrsqrt.pop %v1735
          %v1737 = vmul.f32 %v1729, %v1736
          %v1739 = vlaneseq
          %v1740 = vshrl.u32 %v1739, 7
          %v1741 = vsub.s32 0, %v1740
          %v1742 = vrot.slane %v1722, %v1741
          %v1744 = vmul.f32 %v1737, %v1742
          %v1746 = vlaneseq
          %v1747 = vshrl.u32 %v1746, 7
          %v1748 = vsub.s32 0, %v1747
          %v1749 = vrot.slane %v1723, %v1748
          %v1751 = vadd.f32 %v1744, %v1749
          %v1752 = vld [vmem:[#allocation11] sm:$0xff]
          %v1753 = vld [vmem:[#allocation11 + $0x8] sm:$0xff]
          %v1754 = vld [vmem:[#allocation11 + $0x10] sm:$0xff]
          %v1755 = vld [vmem:[#allocation11 + $0x18] sm:$0xff]
          %v1756 = vld [vmem:[%s12] sm:$0x1]
          %v1758 = vlaneseq
          %v1759 = vshrl.u32 %v1758, 7
          %v1760 = vsub.s32 0, %v1759
          %v1761 = vrot.slane %v1756, %v1760
          %v1764 = vsel %vm1646, %v1751, 0
          %1766 = vmatprep.subr.mxu0 0.0
          %1767 = vmatpush1.msra.mxu0 %v1752
          %1768 = vmatprep.subr.mxu0 0.0
          %1769 = vmatpush1.msra.mxu0 %v1753
          %1770 = vmatprep.subr.mxu0 0.0
          %1771 = vmatpush1.msra.mxu0 %v1754
          %1772 = vmatprep.subr.mxu0 0.0
          %1773 = vmatpush1.msra.mxu0 %v1755
          %1774 = vmatprep.subr.mxu0 0.0
          %1775 = vmatpush1.msra.mxu0 0.0
          %1776 = vmatprep.subr.mxu0 0.0
          %1777 = vmatpush1.msra.mxu0 0.0
          %1778 = vmatprep.subr.mxu0 0.0
          %1779 = vmatpush1.msra.mxu0 0.0
          %1780 = vmatprep.subr.mxu0 0.0
          %1781 = vmatpush1.msra.mxu0 0.0
          %1782 = vmatprep.subr.mxu0 0.0
          %1783 = vmatpush1.msra.mxu0 0.0
          %1784 = vmatprep.subr.mxu0 0.0
          %1785 = vmatpush1.msra.mxu0 0.0
          %1786 = vmatprep.subr.mxu0 0.0
          %1787 = vmatpush1.msra.mxu0 0.0
          %1788 = vmatprep.subr.mxu0 0.0
          %1789 = vmatpush1.msra.mxu0 0.0
          %1790 = vmatprep.subr.mxu0 0.0
          %1791 = vmatpush1.msra.mxu0 0.0
          %1792 = vmatprep.subr.mxu0 0.0
          %1793 = vmatpush1.msra.mxu0 0.0
          %1794 = vmatprep.subr.mxu0 0.0
          %1795 = vmatpush1.msra.mxu0 0.0
          %1796 = vmatprep.subr.mxu0 0.0
          %1797 = vmatpush1.msra.mxu0 0.0
          %1798 = vmatprep.subr.mxu0 0.0
          %1799 = vmatpush1.msra.mxu0 0.0
          %1800 = vmatprep.subr.mxu0 0.0
          %1801 = vmatpush1.msra.mxu0 0.0
          %1802 = vmatprep.subr.mxu0 0.0
          %1803 = vmatpush1.msra.mxu0 0.0
          %1804 = vmatprep.subr.mxu0 0.0
          %1805 = vmatpush1.msra.mxu0 0.0
          %1806 = vmatprep.subr.mxu0 0.0
          %1807 = vmatpush1.msra.mxu0 0.0
          %1808 = vmatprep.subr.mxu0 0.0
          %1809 = vmatpush1.msra.mxu0 0.0
          %1810 = vmatprep.subr.mxu0 0.0
          %1811 = vmatpush1.msra.mxu0 0.0
          %1812 = vmatprep.subr.mxu0 0.0
          %1813 = vmatpush1.msra.mxu0 0.0
          %1814 = vmatprep.subr.mxu0 0.0
          %1815 = vmatpush1.msra.mxu0 0.0
          %1816 = vmatprep.subr.mxu0 0.0
          %1817 = vmatpush1.msra.mxu0 0.0
          %1818 = vmatprep.subr.mxu0 0.0
          %1819 = vmatpush1.msra.mxu0 0.0
          %1820 = vmatprep.subr.mxu0 0.0
          %1821 = vmatpush1.msra.mxu0 0.0
          %1822 = vmatprep.subr.mxu0 0.0
          %1823 = vmatpush1.msra.mxu0 0.0
          %1824 = vmatprep.subr.mxu0 0.0
          %1825 = vmatpush1.msra.mxu0 0.0
          %1826 = vmatprep.subr.mxu0 0.0
          %1827 = vmatpush1.msra.mxu0 0.0
          %1828 = vmatprep.subr.mxu0 0.0
          %1829 = vmatpush1.msra.mxu0 0.0
          %1830 = vmatprep.mubr.f32.mxu0 0.0
          %1831 = vmatmul.mubr.f32.gmra.mrb[0].mxu0 %v1764
          %v1832 = vpop.f32.mrb[0].mxu0
          %v1833 = vadd.f32 %v1761, %v1832
          %v1834 = vpop.f32.mrb[0].mxu0
          %1835 = vdwg.mxu0
          %v1836 = vmax.f32 %v1833, 0.0
          %v1837 = vld [vmem:[%s13] sm:$0xff]
          %v1838 = vld [vmem:[%s13 + $0x8] sm:$0xff]
          %v1839 = vld [vmem:[%s13 + $0x10] sm:$0xff]
          %v1840 = vld [vmem:[%s13 + $0x18] sm:$0xff]
          %v1841 = vld [vmem:[%s13 + $0x20] sm:$0xff]
          %v1842 = vld [vmem:[%s13 + $0x28] sm:$0xff]
          %v1843 = vld [vmem:[%s13 + $0x30] sm:$0xff]
          %v1844 = vld [vmem:[%s13 + $0x38] sm:$0xff]
          %v1845 = vld [vmem:[%s14] sm:$0x1]
          %v1847 = vlaneseq
          %v1848 = vshrl.u32 %v1847, 7
          %v1849 = vsub.s32 0, %v1848
          %v1850 = vrot.slane %v1845, %v1849
          %vm1852 = vcmask 523264
          %v1854 = vsel %vm1852, %v1836, 0
          %1856 = vmatprep.subr.mxu0 0.0
          %1857 = vmatpush1.msra.mxu0 %v1837
          %1858 = vmatprep.subr.mxu0 0.0
          %1859 = vmatpush1.msra.mxu0 %v1838
          %1860 = vmatprep.subr.mxu0 0.0
          %1861 = vmatpush1.msra.mxu0 %v1839
          %1862 = vmatprep.subr.mxu0 0.0
          %1863 = vmatpush1.msra.mxu0 %v1840
          %1864 = vmatprep.subr.mxu0 0.0
          %1865 = vmatpush1.msra.mxu0 %v1841
          %1866 = vmatprep.subr.mxu0 0.0
          %1867 = vmatpush1.msra.mxu0 %v1842
          %1868 = vmatprep.subr.mxu0 0.0
          %1869 = vmatpush1.msra.mxu0 %v1843
          %1870 = vmatprep.subr.mxu0 0.0
          %1871 = vmatpush1.msra.mxu0 %v1844
          %1872 = vmatprep.subr.mxu0 0.0
          %1873 = vmatpush1.msra.mxu0 0.0
          %1874 = vmatprep.subr.mxu0 0.0
          %1875 = vmatpush1.msra.mxu0 0.0
          %1876 = vmatprep.subr.mxu0 0.0
          %1877 = vmatpush1.msra.mxu0 0.0
          %1878 = vmatprep.subr.mxu0 0.0
          %1879 = vmatpush1.msra.mxu0 0.0
          %1880 = vmatprep.subr.mxu0 0.0
          %1881 = vmatpush1.msra.mxu0 0.0
          %1882 = vmatprep.subr.mxu0 0.0
          %1883 = vmatpush1.msra.mxu0 0.0
          %1884 = vmatprep.subr.mxu0 0.0
          %1885 = vmatpush1.msra.mxu0 0.0
          %1886 = vmatprep.subr.mxu0 0.0
          %1887 = vmatpush1.msra.mxu0 0.0
          %1888 = vmatprep.subr.mxu0 0.0
          %1889 = vmatpush1.msra.mxu0 0.0
          %1890 = vmatprep.subr.mxu0 0.0
          %1891 = vmatpush1.msra.mxu0 0.0
          %1892 = vmatprep.subr.mxu0 0.0
          %1893 = vmatpush1.msra.mxu0 0.0
          %1894 = vmatprep.subr.mxu0 0.0
          %1895 = vmatpush1.msra.mxu0 0.0
          %1896 = vmatprep.subr.mxu0 0.0
          %1897 = vmatpush1.msra.mxu0 0.0
          %1898 = vmatprep.subr.mxu0 0.0
          %1899 = vmatpush1.msra.mxu0 0.0
          %1900 = vmatprep.subr.mxu0 0.0
          %1901 = vmatpush1.msra.mxu0 0.0
          %1902 = vmatprep.subr.mxu0 0.0
          %1903 = vmatpush1.msra.mxu0 0.0
          %1904 = vmatprep.subr.mxu0 0.0
          %1905 = vmatpush1.msra.mxu0 0.0
          %1906 = vmatprep.subr.mxu0 0.0
          %1907 = vmatpush1.msra.mxu0 0.0
          %1908 = vmatprep.subr.mxu0 0.0
          %1909 = vmatpush1.msra.mxu0 0.0
          %1910 = vmatprep.subr.mxu0 0.0
          %1911 = vmatpush1.msra.mxu0 0.0
          %1912 = vmatprep.subr.mxu0 0.0
          %1913 = vmatpush1.msra.mxu0 0.0
          %1914 = vmatprep.subr.mxu0 0.0
          %1915 = vmatpush1.msra.mxu0 0.0
          %1916 = vmatprep.subr.mxu0 0.0
          %1917 = vmatpush1.msra.mxu0 0.0
          %1918 = vmatprep.subr.mxu0 0.0
          %1919 = vmatpush1.msra.mxu0 0.0
          %1920 = vmatprep.mubr.f32.mxu0 0.0
          %1921 = vmatmul.mubr.f32.gmra.mrb[0].mxu0 %v1854
          %v1922 = vpop.f32.mrb[0].mxu0
          %v1923 = vadd.f32 %v1850, %v1922
          %v1924 = vpop.f32.mrb[0].mxu0
          %1925 = vdwg.mxu0
          %v1926 = vadd.f32 %v1751, %v1923
          %v1927 = vld [vmem:[%s9] sm:$0x1]
          %v1928 = vld [vmem:[%s10] sm:$0x1]
          %v1929 = vsel %vm1646, %v1926, 0.0
          %1930 = vadd.xlane.f32.xlu0 %v1929
          %v1931 = vpop.xlane.xlu0 %1930
          %v1932 = vmul.f32 %v1931, %v1727
          %v1933 = vsub.f32 %v1926, %v1932
          %v1934 = vmul.f32 %v1933, %v1933
          %v1935 = vsel %vm1646, %v1934, 0.0
          %1936 = vadd.xlane.f32.xlu0 %v1935
          %v1937 = vpop.xlane.xlu0 %1936
          %v1938 = vmul.f32 %v1937, %v1727
          %v1939 = vadd.f32 %v1938, 1e-05
          %v1940 = vrsqrt.pop %v1939
          %v1941 = vmul.f32 %v1933, %v1940
          %v1943 = vlaneseq
          %v1944 = vshrl.u32 %v1943, 7
          %v1945 = vsub.s32 0, %v1944
          %v1946 = vrot.slane %v1927, %v1945
          %v1948 = vmul.f32 %v1941, %v1946
          %v1950 = vlaneseq
          %v1951 = vshrl.u32 %v1950, 7
          %v1952 = vsub.s32 0, %v1951
          %v1953 = vrot.slane %v1928, %v1952
          %v1955 = vadd.f32 %v1948, %v1953
          %1956 = vst.msk [vmem:[%s673] sm:$0xff] %vm1646, %v1955
        $region104: #{tpu_custom_call.1} parent=79 // pred_fallthru
          _
        %s1957 = sand.u32 %s415, 1
        %s1958 = scalar_lea.sflag [#allocation7], %s1957
        %s1959 = sand.u32 %s415, 1
        %s1960 = smul.addr %s1959, 8
        %s1961 = scalar_lea.vmem [#allocation13], %s1960
        // Predicated region
        $region105: #{tpu_custom_call.1} parent=79 // pred_check
          %p1962 = pneg %p425
        $region106: #{tpu_custom_call.1} parent=79 // pred_check_branch
          %1964 = sbr.rel (%p1962) target = $region108
        $region107: #{tpu_custom_call.1} parent=79 // pred_region
          %s1966 = ssub.s32 128, 128
          %1967 = vsyncadd %s1958, %s1966
          %s1968 = sadd.s32 %s42, %s41
          %s1969 = smul.addr %s1968, 128
          %s1970 = scalar_lea.hbm %s15, %s1969
          %s1972 = sshll.u32 %s1961, 4
          %s1973 = int_to_ptr.vmem [resolvable:$true] %s1972
          %1975 = dma.vmem_to_hbm [thread:$0]  %s1973, 128, %s1970, %s1958
        $region108: #{tpu_custom_call.1} parent=79 // pred_fallthru
          _
      $region80: #{tpu_custom_call.1} parent=5 // pred_fallthru
        _
      %p1976 = scmp.le.s32.totalorder 2, %s31
      // Predicated region
      $region109: #{tpu_custom_call.1} parent=5 // pred_check
        %p1977 = pneg %p1976
      $region110: #{tpu_custom_call.1} parent=5 // pred_check_branch
        %1979 = sbr.rel (%p1977) target = $region112
      $region111: #{tpu_custom_call.1} parent=5 // pred_region
        %s1980 = ssub.s32 %s31, 2
        // Predicated region
        $region113: #{tpu_custom_call.1} parent=111 // pred_check
          %p1981 = pneg %p431
        $region114: #{tpu_custom_call.1} parent=111 // pred_check_branch
          %1983 = sbr.rel (%p1981) target = $region116
        $region115: #{tpu_custom_call.1} parent=111 // pred_region
          %s1984 = sand.u32 %s416, 1
          %s1985 = scalar_lea.sflag [#allocation7], %s1984
          %s1986 = sand.u32 %s416, 1
          %s1987 = smul.addr %s1986, 8
          %s1988 = scalar_lea.vmem [#allocation13], %s1987
          %1989 = dma.done %s1985, 128
        $region116: #{tpu_custom_call.1} parent=111 // pred_fallthru
          _
      $region112: #{tpu_custom_call.1} parent=5 // pred_fallthru
        _
    $region6: #{tpu_custom_call.1} parent=1 // loop_footer
      %s35 = sadd.s32 1, %s31
    $region7: #{tpu_custom_call.1} parent=1 // loop_footer_branch
      %30 = sbr.rel target = $region3
    $region8: #{tpu_custom_call.1} parent=1 // loop_exit
      _
    %1990 = vsyncpa [#allocation6], 1
    %s1991 = scalar_lea.sflag [#allocation6], 1
    %1992 = vsyncpa %s1991, 1
    %1993 = vsyncpa [#allocation9], 1
    %s1994 = scalar_lea.sflag [#allocation9], 1
    %1995 = vsyncpa %s1994, 1
    %1996 = vsyncpa [#allocation12], 1
    %1997 = vsyncpa [#allocation7], 1
    %s1998 = scalar_lea.sflag [#allocation7], 1
    %1999 = vsyncpa %s1998, 1

</llo_original>
